<compile_context>
chip_gen: v7x
topology: tpu7x:2x2x1
jax: 0.10.0
libtpu: 0.0.40
codegen_flags: <defaults>
</compile_context>

<pallas_src>
import math
import functools

import jax
import jax.numpy as jnp
from jax.experimental import pallas as pl
from jax.experimental.pallas import tpu as pltpu


_NT_DIMS = (((1,), (1,)), ((), ()))  # contract last axes of both operands: q . k^T


def _encoder_layer_kernel(
    x_ref,
    wq_ref, bq_ref, wk_ref, bk_ref, wv_ref, bv_ref, wo_ref, bo_ref,
    ln1_g_ref, ln1_b_ref,
    w1_ref, b1_ref, w2_ref, b2_ref,
    ln2_g_ref, ln2_b_ref,
    out_ref,
    *, batch: int, seq_len: int, n_heads: int, head_dim: int, hid_dim: int,
):
    x = x_ref[...]                        # (B*S, H) f32 — residual path stays f32
    x_bf = x.astype(jnp.bfloat16)         # MXU operands in bf16

    def linear(v_bf, w_ref, b_ref):
        # bf16 x bf16 -> f32 accumulation on the MXU, f32 bias add on the VPU.
        return jnp.dot(v_bf, w_ref[...], preferred_element_type=jnp.float32) + b_ref[...]

    # --- QKV projections over all B*S rows at once ------------------------
    # 1/sqrt(head_dim) is already folded into wq/bq (weight-prep time).
    q = linear(x_bf, wq_ref, bq_ref).astype(jnp.bfloat16)
    k = linear(x_bf, wk_ref, bk_ref).astype(jnp.bfloat16)
    v = linear(x_bf, wv_ref, bv_ref).astype(jnp.bfloat16)

    wo = wo_ref[...]                      # (H, H) bf16, loaded once

    # --- multi-head self-attention with fused output projection -----------
    per_batch = []
    for b in range(batch):                # static unrolled loop (B=2 at toy size)
        r0 = b * seq_len
        qb = q[r0:r0 + seq_len, :]
        kb = k[r0:r0 + seq_len, :]
        vb = v[r0:r0 + seq_len, :]
        acc = jnp.zeros((seq_len, hid_dim), jnp.float32)
        for h in range(n_heads):          # static unrolled loop (4 heads)
            lo = h * head_dim
            qh = qb[:, lo:lo + head_dim]
            kh = kb[:, lo:lo + head_dim]
            vh = vb[:, lo:lo + head_dim]
            # NT matmul: no explicit transpose of kh.
            energy = jax.lax.dot_general(qh, kh, _NT_DIMS,
                                         preferred_element_type=jnp.float32)
            # NOTE: src_mask intentionally unused — in the PyTorch source
            # `energy.masked_fill(...)` is not in-place and its result is
            # discarded, so masking has no effect on the forward pass.
            e = energy - jnp.max(energy, axis=-1, keepdims=True)
            p = jnp.exp(e)
            attn = p / jnp.sum(p, axis=-1, keepdims=True)   # exact reciprocal
            head_out = jnp.dot(attn.astype(jnp.bfloat16), vh,
                               preferred_element_type=jnp.float32)
            # Fused output projection: no (S, H) scratch slab, no lane-offset
            # masked stores, f32 accumulation.
            acc = acc + jnp.dot(head_out.astype(jnp.bfloat16),
                                wo[lo:lo + head_dim, :],
                                preferred_element_type=jnp.float32)
        per_batch.append(acc)

    attn_ctx = jnp.concatenate(per_batch, axis=0) if batch > 1 else per_batch[0]
    attn_out = attn_ctx + bo_ref[...]     # (B*S, H) f32

    # --- residual + layer norm (f32, biased variance, eps=1e-5) ------------
    def layer_norm(val, g_ref, b_ref):
        mu = jnp.mean(val, axis=-1, keepdims=True)
        var = jnp.mean((val - mu) ** 2, axis=-1, keepdims=True)
        return (val - mu) * jax.lax.rsqrt(var + 1e-5) * g_ref[...] + b_ref[...]

    x1 = layer_norm(x + attn_out, ln1_g_ref, ln1_b_ref)

    # --- position-wise feed-forward (batched over all B*S rows) ------------
    hdn = jnp.maximum(linear(x1.astype(jnp.bfloat16), w1_ref, b1_ref), 0.0)  # relu
    ff = linear(hdn.astype(jnp.bfloat16), w2_ref, b2_ref)

    x2 = layer_norm(x1 + ff, ln2_g_ref, ln2_b_ref)

    out_ref[...] = x2.astype(out_ref.dtype)


def prepare_encoder_params(params, *, n_heads):
    """One-time weight preparation: fold the softmax scale into wq/bq and cast
    matmul weights to bf16 (biases / LayerNorm params stay f32). Call once and
    reuse across invocations — avoids a per-call full-weight HBM pass."""
    H = params["wq"].shape[0]
    head_dim = H // n_heads
    scale = jnp.float32(1.0 / math.sqrt(head_dim))

    def bf16(p):
        return p.astype(jnp.bfloat16)

    return (
        bf16(params["wq"] * scale), params["bq"] * scale,
        bf16(params["wk"]), params["bk"],
        bf16(params["wv"]), params["bv"],
        bf16(params["wo"]), params["bo"],
        params["ln1_g"], params["ln1_b"],
        bf16(params["w1"]), params["b1"],
        bf16(params["w2"]), params["b2"],
        params["ln2_g"], params["ln2_b"],
    )


def encoder_layer_pallas(src, src_mask, prepared_params, *, n_heads):
    """src: (B, S, H) float32. src_mask accepted for API parity but unused."""
    del src_mask  # no effect in the reference forward (see note at top)
    B, S, H = src.shape
    head_dim = H // n_heads

    # Flatten batch at the boundary (free XLA reshape): one (B*S, H) block,
    # one grid step — no per-sample pipeline overhead.
    x2d = src.reshape(B * S, H)

    in_specs = [pl.BlockSpec((B * S, H), lambda i: (0, 0))] + [
        pl.BlockSpec(p.shape, lambda i: (0, 0)) for p in prepared_params
    ]
    out_spec = pl.BlockSpec((B * S, H), lambda i: (0, 0))

    kernel = functools.partial(
        _encoder_layer_kernel,
        batch=B, seq_len=S, n_heads=n_heads, head_dim=head_dim, hid_dim=H,
    )

    out2d = pl.pallas_call(
        kernel,
        out_shape=jax.ShapeDtypeStruct((B * S, H), src.dtype),
        grid_spec=pltpu.PrefetchScalarGridSpec(
            num_scalar_prefetch=0,
            grid=(1,),
            in_specs=in_specs,
            out_specs=out_spec,
        ),
        compiler_params=pltpu.CompilerParams(
            dimension_semantics=("arbitrary",),
            # Tiny footprint here; set explicitly as required for realistic
            # sizes on v7x (64 MiB physical / 32 MiB scoped default).
            vmem_limit_bytes=32 * 1024 * 1024,
        ),
    )(x2d, *prepared_params)

    return out2d.reshape(B, S, H)


# --------------------------- pure-JAX reference ---------------------------
def encoder_layer_ref(src, params, *, n_heads):
    B, S, H = src.shape
    hd = H // n_heads

    def lin(x, w, b):
        return x @ w + b

    q = lin(src, params["wq"], params["bq"]).reshape(B, S, n_heads, hd).transpose(0, 2, 1, 3)
    k = lin(src, params["wk"], params["bk"]).reshape(B, S, n_heads, hd).transpose(0, 2, 1, 3)
    v = lin(src, params["wv"], params["bv"]).reshape(B, S, n_heads, hd).transpose(0, 2, 1, 3)
    energy = jnp.einsum("bhqd,bhkd->bhqk", q, k) / math.sqrt(hd)
    attn = jax.nn.softmax(energy, axis=-1)
    x = jnp.einsum("bhqk,bhkd->bhqd", attn, v).transpose(0, 2, 1, 3).reshape(B, S, H)
    x = lin(x, params["wo"], params["bo"])

    def ln(val, g, b):
        mu = jnp.mean(val, axis=-1, keepdims=True)
        var = jnp.mean((val - mu) ** 2, axis=-1, keepdims=True)
        return (val - mu) / jnp.sqrt(var + 1e-5) * g + b

    x1 = ln(src + x, params["ln1_g"], params["ln1_b"])
    ff = lin(jnp.maximum(lin(x1, params["w1"], params["b1"]), 0.0),
             params["w2"], params["b2"])
    return ln(x1 + ff, params["ln2_g"], params["ln2_b"])


if __name__ == "__main__":
    B, S, H = 2, 8, 32
    N_HEADS = 4
    PF_DIM = 64

    key = jax.random.PRNGKey(0)
    keys = jax.random.split(key, 12)

    def w(k, shape):
        return jax.random.normal(k, shape, dtype=jnp.float32) * 0.05

    # All linear weights stored as (in_dim, out_dim); biases as (1, out_dim).
    params = {
        "wq": w(keys[0], (H, H)), "bq": w(keys[1], (1, H)),
        "wk": w(keys[2], (H, H)), "bk": w(keys[3], (1, H)),
        "wv": w(keys[4], (H, H)), "bv": w(keys[5], (1, H)),
        "wo": w(keys[6], (H, H)), "bo": w(keys[7], (1, H)),
        "ln1_g": jnp.ones((1, H), jnp.float32), "ln1_b": jnp.zeros((1, H), jnp.float32),
        "w1": w(keys[8], (H, PF_DIM)), "b1": w(keys[9], (1, PF_DIM)),
        "w2": w(keys[10], (PF_DIM, H)), "b2": w(keys[11], (1, H)),
        "ln2_g": jnp.ones((1, H), jnp.float32), "ln2_b": jnp.zeros((1, H), jnp.float32),
    }

    src = jax.random.normal(jax.random.PRNGKey(42), (B, S, H), dtype=jnp.float32)
    src_mask = jnp.ones((B, 1, 1, S), dtype=jnp.int32)  # unused (see note)

    prepared = prepare_encoder_params(params, n_heads=N_HEADS)  # one-time prep
    out = encoder_layer_pallas(src, src_mask, prepared, n_heads=N_HEADS)
    out = jax.block_until_ready(out)

    ref = encoder_layer_ref(src, params, n_heads=N_HEADS)
    assert out.shape == (B, S, H)
    # Tolerance loosened vs pure-f32: matmul operands are bf16 (f32 accumulation).
    assert jnp.allclose(out, ref, atol=3e-2, rtol=3e-2), "mismatch vs reference"

    print("KERNEL_OK")
</pallas_src>

<mosaic_0001>
module attributes {stable_mosaic.version = 11 : i64} {
  func.func @_encoder_layer_kernel(%arg0: i32, %arg1: memref<16x32xf32, #tpu.memory_space<vmem>>, %arg2: memref<32x32xbf16, #tpu.memory_space<vmem>>, %arg3: memref<1x32xf32, #tpu.memory_space<vmem>>, %arg4: memref<32x32xbf16, #tpu.memory_space<vmem>>, %arg5: memref<1x32xf32, #tpu.memory_space<vmem>>, %arg6: memref<32x32xbf16, #tpu.memory_space<vmem>>, %arg7: memref<1x32xf32, #tpu.memory_space<vmem>>, %arg8: memref<32x32xbf16, #tpu.memory_space<vmem>>, %arg9: memref<1x32xf32, #tpu.memory_space<vmem>>, %arg10: memref<1x32xf32, #tpu.memory_space<vmem>>, %arg11: memref<1x32xf32, #tpu.memory_space<vmem>>, %arg12: memref<32x64xbf16, #tpu.memory_space<vmem>>, %arg13: memref<1x64xf32, #tpu.memory_space<vmem>>, %arg14: memref<64x32xbf16, #tpu.memory_space<vmem>>, %arg15: memref<1x32xf32, #tpu.memory_space<vmem>>, %arg16: memref<1x32xf32, #tpu.memory_space<vmem>>, %arg17: memref<1x32xf32, #tpu.memory_space<vmem>>, %arg18: memref<16x32xf32, #tpu.memory_space<vmem>>) attributes {dimension_semantics = [#tpu.dimension_semantics<arbitrary>], iteration_bounds = array<i64: 1>, scalar_prefetch = 0 : i64, scratch_operands = 0 : i64, tpu.core_type = #tpu.core_type<tc>, window_params = [{pipeline_mode = #tpu.pipeline_mode<synchronous>, transform_indices = @transform_0, window_bounds = array<i64: 16, 32>}, {pipeline_mode = #tpu.pipeline_mode<synchronous>, transform_indices = @transform_1, window_bounds = array<i64: 32, 32>}, {pipeline_mode = #tpu.pipeline_mode<synchronous>, transform_indices = @transform_2, window_bounds = array<i64: 1, 32>}, {pipeline_mode = #tpu.pipeline_mode<synchronous>, transform_indices = @transform_3, window_bounds = array<i64: 32, 32>}, {pipeline_mode = #tpu.pipeline_mode<synchronous>, transform_indices = @transform_4, window_bounds = array<i64: 1, 32>}, {pipeline_mode = #tpu.pipeline_mode<synchronous>, transform_indices = @transform_5, window_bounds = array<i64: 32, 32>}, {pipeline_mode = #tpu.pipeline_mode<synchronous>, transform_indices = @transform_6, window_bounds = array<i64: 1, 32>}, {pipeline_mode = #tpu.pipeline_mode<synchronous>, transform_indices = @transform_7, window_bounds = array<i64: 32, 32>}, {pipeline_mode = #tpu.pipeline_mode<synchronous>, transform_indices = @transform_8, window_bounds = array<i64: 1, 32>}, {pipeline_mode = #tpu.pipeline_mode<synchronous>, transform_indices = @transform_9, window_bounds = array<i64: 1, 32>}, {pipeline_mode = #tpu.pipeline_mode<synchronous>, transform_indices = @transform_10, window_bounds = array<i64: 1, 32>}, {pipeline_mode = #tpu.pipeline_mode<synchronous>, transform_indices = @transform_11, window_bounds = array<i64: 32, 64>}, {pipeline_mode = #tpu.pipeline_mode<synchronous>, transform_indices = @transform_12, window_bounds = array<i64: 1, 64>}, {pipeline_mode = #tpu.pipeline_mode<synchronous>, transform_indices = @transform_13, window_bounds = array<i64: 64, 32>}, {pipeline_mode = #tpu.pipeline_mode<synchronous>, transform_indices = @transform_14, window_bounds = array<i64: 1, 32>}, {pipeline_mode = #tpu.pipeline_mode<synchronous>, transform_indices = @transform_15, window_bounds = array<i64: 1, 32>}, {pipeline_mode = #tpu.pipeline_mode<synchronous>, transform_indices = @transform_16, window_bounds = array<i64: 1, 32>}, {pipeline_mode = #tpu.pipeline_mode<synchronous>, transform_indices = @transform_17, window_bounds = array<i64: 16, 32>}]} {
    %c0 = arith.constant 0 : index
    %c0_0 = arith.constant 0 : index
    %0 = vector.load %arg1[%c0, %c0_0] : memref<16x32xf32, #tpu.memory_space<vmem>>, vector<16x32xf32>
    %1 = arith.truncf %0 : vector<16x32xf32> to vector<16x32xbf16>
    %c0_1 = arith.constant 0 : index
    %c0_2 = arith.constant 0 : index
    %2 = vector.load %arg2[%c0_1, %c0_2] : memref<32x32xbf16, #tpu.memory_space<vmem>>, vector<32x32xbf16>
    %cst = arith.constant dense<0.000000e+00> : vector<16x32xf32>
    %3 = tpu.matmul %1, %2, %cst {dimension_numbers = #tpu.dot_dimension_numbers<[1], [0], [0], [1], [0, 0, 1, 1], [], []>} : vector<16x32xbf16>, vector<32x32xbf16>, vector<16x32xf32> -> vector<16x32xf32>
    %c0_3 = arith.constant 0 : index
    %c0_4 = arith.constant 0 : index
    %4 = vector.load %arg3[%c0_3, %c0_4] : memref<1x32xf32, #tpu.memory_space<vmem>>, vector<1x32xf32>
    %5 = vector.broadcast %4 : vector<1x32xf32> to vector<16x32xf32>
    %6 = arith.addf %3, %5 : vector<16x32xf32>
    %7 = arith.truncf %6 : vector<16x32xf32> to vector<16x32xbf16>
    %c0_5 = arith.constant 0 : index
    %c0_6 = arith.constant 0 : index
    %8 = vector.load %arg4[%c0_5, %c0_6] : memref<32x32xbf16, #tpu.memory_space<vmem>>, vector<32x32xbf16>
    %cst_7 = arith.constant dense<0.000000e+00> : vector<16x32xf32>
    %9 = tpu.matmul %1, %8, %cst_7 {dimension_numbers = #tpu.dot_dimension_numbers<[1], [0], [0], [1], [0, 0, 1, 1], [], []>} : vector<16x32xbf16>, vector<32x32xbf16>, vector<16x32xf32> -> vector<16x32xf32>
    %c0_8 = arith.constant 0 : index
    %c0_9 = arith.constant 0 : index
    %10 = vector.load %arg5[%c0_8, %c0_9] : memref<1x32xf32, #tpu.memory_space<vmem>>, vector<1x32xf32>
    %11 = vector.broadcast %10 : vector<1x32xf32> to vector<16x32xf32>
    %12 = arith.addf %9, %11 : vector<16x32xf32>
    %13 = arith.truncf %12 : vector<16x32xf32> to vector<16x32xbf16>
    %c0_10 = arith.constant 0 : index
    %c0_11 = arith.constant 0 : index
    %14 = vector.load %arg6[%c0_10, %c0_11] : memref<32x32xbf16, #tpu.memory_space<vmem>>, vector<32x32xbf16>
    %cst_12 = arith.constant dense<0.000000e+00> : vector<16x32xf32>
    %15 = tpu.matmul %1, %14, %cst_12 {dimension_numbers = #tpu.dot_dimension_numbers<[1], [0], [0], [1], [0, 0, 1, 1], [], []>} : vector<16x32xbf16>, vector<32x32xbf16>, vector<16x32xf32> -> vector<16x32xf32>
    %c0_13 = arith.constant 0 : index
    %c0_14 = arith.constant 0 : index
    %16 = vector.load %arg7[%c0_13, %c0_14] : memref<1x32xf32, #tpu.memory_space<vmem>>, vector<1x32xf32>
    %17 = vector.broadcast %16 : vector<1x32xf32> to vector<16x32xf32>
    %18 = arith.addf %15, %17 : vector<16x32xf32>
    %19 = arith.truncf %18 : vector<16x32xf32> to vector<16x32xbf16>
    %c0_15 = arith.constant 0 : index
    %c0_16 = arith.constant 0 : index
    %20 = vector.load %arg8[%c0_15, %c0_16] : memref<32x32xbf16, #tpu.memory_space<vmem>>, vector<32x32xbf16>
    %21 = vector.extract_strided_slice %7 {offsets = [0, 0], sizes = [8, 32], strides = [1, 1]} : vector<16x32xbf16> to vector<8x32xbf16>
    %22 = vector.extract_strided_slice %13 {offsets = [0, 0], sizes = [8, 32], strides = [1, 1]} : vector<16x32xbf16> to vector<8x32xbf16>
    %23 = vector.extract_strided_slice %19 {offsets = [0, 0], sizes = [8, 32], strides = [1, 1]} : vector<16x32xbf16> to vector<8x32xbf16>
    %cst_17 = arith.constant 0.000000e+00 : f32
    %24 = vector.broadcast %cst_17 : f32 to vector<8x32xf32>
    %25 = vector.extract_strided_slice %21 {offsets = [0, 0], sizes = [8, 8], strides = [1, 1]} : vector<8x32xbf16> to vector<8x8xbf16>
    %26 = vector.extract_strided_slice %22 {offsets = [0, 0], sizes = [8, 8], strides = [1, 1]} : vector<8x32xbf16> to vector<8x8xbf16>
    %27 = vector.extract_strided_slice %23 {offsets = [0, 0], sizes = [8, 8], strides = [1, 1]} : vector<8x32xbf16> to vector<8x8xbf16>
    %cst_18 = arith.constant dense<0.000000e+00> : vector<8x8xf32>
    %28 = tpu.matmul %25, %26, %cst_18 {dimension_numbers = #tpu.dot_dimension_numbers<[1], [1], [0], [0], [0, 0, 1, 0], [], []>} : vector<8x8xbf16>, vector<8x8xbf16>, vector<8x8xf32> -> vector<8x8xf32>
    %cst_19 = arith.constant dense<0xFF800000> : vector<8xf32>
    %29 = vector.multi_reduction <maximumf>, %28, %cst_19 [1] : vector<8x8xf32> to vector<8xf32>
    %30 = vector.shape_cast %29 : vector<8xf32> to vector<8x1xf32>
    %31 = vector.broadcast %30 : vector<8x1xf32> to vector<8x8xf32>
    %32 = arith.subf %28, %31 : vector<8x8xf32>
    %33 = math.exp %32 : vector<8x8xf32>
    %cst_20 = arith.constant dense<0.000000e+00> : vector<8xf32>
    %34 = vector.multi_reduction <add>, %33, %cst_20 [1] : vector<8x8xf32> to vector<8xf32>
    %35 = vector.shape_cast %34 : vector<8xf32> to vector<8x1xf32>
    %36 = vector.broadcast %35 : vector<8x1xf32> to vector<8x8xf32>
    %37 = arith.divf %33, %36 : vector<8x8xf32>
    %38 = arith.truncf %37 : vector<8x8xf32> to vector<8x8xbf16>
    %cst_21 = arith.constant dense<0.000000e+00> : vector<8x8xf32>
    %39 = tpu.matmul %38, %27, %cst_21 {dimension_numbers = #tpu.dot_dimension_numbers<[1], [0], [0], [1], [0, 0, 1, 1], [], []>} : vector<8x8xbf16>, vector<8x8xbf16>, vector<8x8xf32> -> vector<8x8xf32>
    %40 = arith.truncf %39 : vector<8x8xf32> to vector<8x8xbf16>
    %41 = vector.extract_strided_slice %20 {offsets = [0, 0], sizes = [8, 32], strides = [1, 1]} : vector<32x32xbf16> to vector<8x32xbf16>
    %cst_22 = arith.constant dense<0.000000e+00> : vector<8x32xf32>
    %42 = tpu.matmul %40, %41, %cst_22 {dimension_numbers = #tpu.dot_dimension_numbers<[1], [0], [0], [1], [0, 0, 1, 1], [], []>} : vector<8x8xbf16>, vector<8x32xbf16>, vector<8x32xf32> -> vector<8x32xf32>
    %43 = arith.addf %24, %42 : vector<8x32xf32>
    %44 = vector.extract_strided_slice %21 {offsets = [0, 8], sizes = [8, 8], strides = [1, 1]} : vector<8x32xbf16> to vector<8x8xbf16>
    %45 = vector.extract_strided_slice %22 {offsets = [0, 8], sizes = [8, 8], strides = [1, 1]} : vector<8x32xbf16> to vector<8x8xbf16>
    %46 = vector.extract_strided_slice %23 {offsets = [0, 8], sizes = [8, 8], strides = [1, 1]} : vector<8x32xbf16> to vector<8x8xbf16>
    %cst_23 = arith.constant dense<0.000000e+00> : vector<8x8xf32>
    %47 = tpu.matmul %44, %45, %cst_23 {dimension_numbers = #tpu.dot_dimension_numbers<[1], [1], [0], [0], [0, 0, 1, 0], [], []>} : vector<8x8xbf16>, vector<8x8xbf16>, vector<8x8xf32> -> vector<8x8xf32>
    %cst_24 = arith.constant dense<0xFF800000> : vector<8xf32>
    %48 = vector.multi_reduction <maximumf>, %47, %cst_24 [1] : vector<8x8xf32> to vector<8xf32>
    %49 = vector.shape_cast %48 : vector<8xf32> to vector<8x1xf32>
    %50 = vector.broadcast %49 : vector<8x1xf32> to vector<8x8xf32>
    %51 = arith.subf %47, %50 : vector<8x8xf32>
    %52 = math.exp %51 : vector<8x8xf32>
    %cst_25 = arith.constant dense<0.000000e+00> : vector<8xf32>
    %53 = vector.multi_reduction <add>, %52, %cst_25 [1] : vector<8x8xf32> to vector<8xf32>
    %54 = vector.shape_cast %53 : vector<8xf32> to vector<8x1xf32>
    %55 = vector.broadcast %54 : vector<8x1xf32> to vector<8x8xf32>
    %56 = arith.divf %52, %55 : vector<8x8xf32>
    %57 = arith.truncf %56 : vector<8x8xf32> to vector<8x8xbf16>
    %cst_26 = arith.constant dense<0.000000e+00> : vector<8x8xf32>
    %58 = tpu.matmul %57, %46, %cst_26 {dimension_numbers = #tpu.dot_dimension_numbers<[1], [0], [0], [1], [0, 0, 1, 1], [], []>} : vector<8x8xbf16>, vector<8x8xbf16>, vector<8x8xf32> -> vector<8x8xf32>
    %59 = arith.truncf %58 : vector<8x8xf32> to vector<8x8xbf16>
    %60 = vector.extract_strided_slice %20 {offsets = [8, 0], sizes = [8, 32], strides = [1, 1]} : vector<32x32xbf16> to vector<8x32xbf16>
    %cst_27 = arith.constant dense<0.000000e+00> : vector<8x32xf32>
    %61 = tpu.matmul %59, %60, %cst_27 {dimension_numbers = #tpu.dot_dimension_numbers<[1], [0], [0], [1], [0, 0, 1, 1], [], []>} : vector<8x8xbf16>, vector<8x32xbf16>, vector<8x32xf32> -> vector<8x32xf32>
    %62 = arith.addf %43, %61 : vector<8x32xf32>
    %63 = vector.extract_strided_slice %21 {offsets = [0, 16], sizes = [8, 8], strides = [1, 1]} : vector<8x32xbf16> to vector<8x8xbf16>
    %64 = vector.extract_strided_slice %22 {offsets = [0, 16], sizes = [8, 8], strides = [1, 1]} : vector<8x32xbf16> to vector<8x8xbf16>
    %65 = vector.extract_strided_slice %23 {offsets = [0, 16], sizes = [8, 8], strides = [1, 1]} : vector<8x32xbf16> to vector<8x8xbf16>
    %cst_28 = arith.constant dense<0.000000e+00> : vector<8x8xf32>
    %66 = tpu.matmul %63, %64, %cst_28 {dimension_numbers = #tpu.dot_dimension_numbers<[1], [1], [0], [0], [0, 0, 1, 0], [], []>} : vector<8x8xbf16>, vector<8x8xbf16>, vector<8x8xf32> -> vector<8x8xf32>
    %cst_29 = arith.constant dense<0xFF800000> : vector<8xf32>
    %67 = vector.multi_reduction <maximumf>, %66, %cst_29 [1] : vector<8x8xf32> to vector<8xf32>
    %68 = vector.shape_cast %67 : vector<8xf32> to vector<8x1xf32>
    %69 = vector.broadcast %68 : vector<8x1xf32> to vector<8x8xf32>
    %70 = arith.subf %66, %69 : vector<8x8xf32>
    %71 = math.exp %70 : vector<8x8xf32>
    %cst_30 = arith.constant dense<0.000000e+00> : vector<8xf32>
    %72 = vector.multi_reduction <add>, %71, %cst_30 [1] : vector<8x8xf32> to vector<8xf32>
    %73 = vector.shape_cast %72 : vector<8xf32> to vector<8x1xf32>
    %74 = vector.broadcast %73 : vector<8x1xf32> to vector<8x8xf32>
    %75 = arith.divf %71, %74 : vector<8x8xf32>
    %76 = arith.truncf %75 : vector<8x8xf32> to vector<8x8xbf16>
    %cst_31 = arith.constant dense<0.000000e+00> : vector<8x8xf32>
    %77 = tpu.matmul %76, %65, %cst_31 {dimension_numbers = #tpu.dot_dimension_numbers<[1], [0], [0], [1], [0, 0, 1, 1], [], []>} : vector<8x8xbf16>, vector<8x8xbf16>, vector<8x8xf32> -> vector<8x8xf32>
    %78 = arith.truncf %77 : vector<8x8xf32> to vector<8x8xbf16>
    %79 = vector.extract_strided_slice %20 {offsets = [16, 0], sizes = [8, 32], strides = [1, 1]} : vector<32x32xbf16> to vector<8x32xbf16>
    %cst_32 = arith.constant dense<0.000000e+00> : vector<8x32xf32>
    %80 = tpu.matmul %78, %79, %cst_32 {dimension_numbers = #tpu.dot_dimension_numbers<[1], [0], [0], [1], [0, 0, 1, 1], [], []>} : vector<8x8xbf16>, vector<8x32xbf16>, vector<8x32xf32> -> vector<8x32xf32>
    %81 = arith.addf %62, %80 : vector<8x32xf32>
    %82 = vector.extract_strided_slice %21 {offsets = [0, 24], sizes = [8, 8], strides = [1, 1]} : vector<8x32xbf16> to vector<8x8xbf16>
    %83 = vector.extract_strided_slice %22 {offsets = [0, 24], sizes = [8, 8], strides = [1, 1]} : vector<8x32xbf16> to vector<8x8xbf16>
    %84 = vector.extract_strided_slice %23 {offsets = [0, 24], sizes = [8, 8], strides = [1, 1]} : vector<8x32xbf16> to vector<8x8xbf16>
    %cst_33 = arith.constant dense<0.000000e+00> : vector<8x8xf32>
    %85 = tpu.matmul %82, %83, %cst_33 {dimension_numbers = #tpu.dot_dimension_numbers<[1], [1], [0], [0], [0, 0, 1, 0], [], []>} : vector<8x8xbf16>, vector<8x8xbf16>, vector<8x8xf32> -> vector<8x8xf32>
    %cst_34 = arith.constant dense<0xFF800000> : vector<8xf32>
    %86 = vector.multi_reduction <maximumf>, %85, %cst_34 [1] : vector<8x8xf32> to vector<8xf32>
    %87 = vector.shape_cast %86 : vector<8xf32> to vector<8x1xf32>
    %88 = vector.broadcast %87 : vector<8x1xf32> to vector<8x8xf32>
    %89 = arith.subf %85, %88 : vector<8x8xf32>
    %90 = math.exp %89 : vector<8x8xf32>
    %cst_35 = arith.constant dense<0.000000e+00> : vector<8xf32>
    %91 = vector.multi_reduction <add>, %90, %cst_35 [1] : vector<8x8xf32> to vector<8xf32>
    %92 = vector.shape_cast %91 : vector<8xf32> to vector<8x1xf32>
    %93 = vector.broadcast %92 : vector<8x1xf32> to vector<8x8xf32>
    %94 = arith.divf %90, %93 : vector<8x8xf32>
    %95 = arith.truncf %94 : vector<8x8xf32> to vector<8x8xbf16>
    %cst_36 = arith.constant dense<0.000000e+00> : vector<8x8xf32>
    %96 = tpu.matmul %95, %84, %cst_36 {dimension_numbers = #tpu.dot_dimension_numbers<[1], [0], [0], [1], [0, 0, 1, 1], [], []>} : vector<8x8xbf16>, vector<8x8xbf16>, vector<8x8xf32> -> vector<8x8xf32>
    %97 = arith.truncf %96 : vector<8x8xf32> to vector<8x8xbf16>
    %98 = vector.extract_strided_slice %20 {offsets = [24, 0], sizes = [8, 32], strides = [1, 1]} : vector<32x32xbf16> to vector<8x32xbf16>
    %cst_37 = arith.constant dense<0.000000e+00> : vector<8x32xf32>
    %99 = tpu.matmul %97, %98, %cst_37 {dimension_numbers = #tpu.dot_dimension_numbers<[1], [0], [0], [1], [0, 0, 1, 1], [], []>} : vector<8x8xbf16>, vector<8x32xbf16>, vector<8x32xf32> -> vector<8x32xf32>
    %100 = arith.addf %81, %99 : vector<8x32xf32>
    %101 = vector.extract_strided_slice %7 {offsets = [8, 0], sizes = [8, 32], strides = [1, 1]} : vector<16x32xbf16> to vector<8x32xbf16>
    %102 = vector.extract_strided_slice %13 {offsets = [8, 0], sizes = [8, 32], strides = [1, 1]} : vector<16x32xbf16> to vector<8x32xbf16>
    %103 = vector.extract_strided_slice %19 {offsets = [8, 0], sizes = [8, 32], strides = [1, 1]} : vector<16x32xbf16> to vector<8x32xbf16>
    %cst_38 = arith.constant 0.000000e+00 : f32
    %104 = vector.broadcast %cst_38 : f32 to vector<8x32xf32>
    %105 = vector.extract_strided_slice %101 {offsets = [0, 0], sizes = [8, 8], strides = [1, 1]} : vector<8x32xbf16> to vector<8x8xbf16>
    %106 = vector.extract_strided_slice %102 {offsets = [0, 0], sizes = [8, 8], strides = [1, 1]} : vector<8x32xbf16> to vector<8x8xbf16>
    %107 = vector.extract_strided_slice %103 {offsets = [0, 0], sizes = [8, 8], strides = [1, 1]} : vector<8x32xbf16> to vector<8x8xbf16>
    %cst_39 = arith.constant dense<0.000000e+00> : vector<8x8xf32>
    %108 = tpu.matmul %105, %106, %cst_39 {dimension_numbers = #tpu.dot_dimension_numbers<[1], [1], [0], [0], [0, 0, 1, 0], [], []>} : vector<8x8xbf16>, vector<8x8xbf16>, vector<8x8xf32> -> vector<8x8xf32>
    %cst_40 = arith.constant dense<0xFF800000> : vector<8xf32>
    %109 = vector.multi_reduction <maximumf>, %108, %cst_40 [1] : vector<8x8xf32> to vector<8xf32>
    %110 = vector.shape_cast %109 : vector<8xf32> to vector<8x1xf32>
    %111 = vector.broadcast %110 : vector<8x1xf32> to vector<8x8xf32>
    %112 = arith.subf %108, %111 : vector<8x8xf32>
    %113 = math.exp %112 : vector<8x8xf32>
    %cst_41 = arith.constant dense<0.000000e+00> : vector<8xf32>
    %114 = vector.multi_reduction <add>, %113, %cst_41 [1] : vector<8x8xf32> to vector<8xf32>
    %115 = vector.shape_cast %114 : vector<8xf32> to vector<8x1xf32>
    %116 = vector.broadcast %115 : vector<8x1xf32> to vector<8x8xf32>
    %117 = arith.divf %113, %116 : vector<8x8xf32>
    %118 = arith.truncf %117 : vector<8x8xf32> to vector<8x8xbf16>
    %cst_42 = arith.constant dense<0.000000e+00> : vector<8x8xf32>
    %119 = tpu.matmul %118, %107, %cst_42 {dimension_numbers = #tpu.dot_dimension_numbers<[1], [0], [0], [1], [0, 0, 1, 1], [], []>} : vector<8x8xbf16>, vector<8x8xbf16>, vector<8x8xf32> -> vector<8x8xf32>
    %120 = arith.truncf %119 : vector<8x8xf32> to vector<8x8xbf16>
    %121 = vector.extract_strided_slice %20 {offsets = [0, 0], sizes = [8, 32], strides = [1, 1]} : vector<32x32xbf16> to vector<8x32xbf16>
    %cst_43 = arith.constant dense<0.000000e+00> : vector<8x32xf32>
    %122 = tpu.matmul %120, %121, %cst_43 {dimension_numbers = #tpu.dot_dimension_numbers<[1], [0], [0], [1], [0, 0, 1, 1], [], []>} : vector<8x8xbf16>, vector<8x32xbf16>, vector<8x32xf32> -> vector<8x32xf32>
    %123 = arith.addf %104, %122 : vector<8x32xf32>
    %124 = vector.extract_strided_slice %101 {offsets = [0, 8], sizes = [8, 8], strides = [1, 1]} : vector<8x32xbf16> to vector<8x8xbf16>
    %125 = vector.extract_strided_slice %102 {offsets = [0, 8], sizes = [8, 8], strides = [1, 1]} : vector<8x32xbf16> to vector<8x8xbf16>
    %126 = vector.extract_strided_slice %103 {offsets = [0, 8], sizes = [8, 8], strides = [1, 1]} : vector<8x32xbf16> to vector<8x8xbf16>
    %cst_44 = arith.constant dense<0.000000e+00> : vector<8x8xf32>
    %127 = tpu.matmul %124, %125, %cst_44 {dimension_numbers = #tpu.dot_dimension_numbers<[1], [1], [0], [0], [0, 0, 1, 0], [], []>} : vector<8x8xbf16>, vector<8x8xbf16>, vector<8x8xf32> -> vector<8x8xf32>
    %cst_45 = arith.constant dense<0xFF800000> : vector<8xf32>
    %128 = vector.multi_reduction <maximumf>, %127, %cst_45 [1] : vector<8x8xf32> to vector<8xf32>
    %129 = vector.shape_cast %128 : vector<8xf32> to vector<8x1xf32>
    %130 = vector.broadcast %129 : vector<8x1xf32> to vector<8x8xf32>
    %131 = arith.subf %127, %130 : vector<8x8xf32>
    %132 = math.exp %131 : vector<8x8xf32>
    %cst_46 = arith.constant dense<0.000000e+00> : vector<8xf32>
    %133 = vector.multi_reduction <add>, %132, %cst_46 [1] : vector<8x8xf32> to vector<8xf32>
    %134 = vector.shape_cast %133 : vector<8xf32> to vector<8x1xf32>
    %135 = vector.broadcast %134 : vector<8x1xf32> to vector<8x8xf32>
    %136 = arith.divf %132, %135 : vector<8x8xf32>
    %137 = arith.truncf %136 : vector<8x8xf32> to vector<8x8xbf16>
    %cst_47 = arith.constant dense<0.000000e+00> : vector<8x8xf32>
    %138 = tpu.matmul %137, %126, %cst_47 {dimension_numbers = #tpu.dot_dimension_numbers<[1], [0], [0], [1], [0, 0, 1, 1], [], []>} : vector<8x8xbf16>, vector<8x8xbf16>, vector<8x8xf32> -> vector<8x8xf32>
    %139 = arith.truncf %138 : vector<8x8xf32> to vector<8x8xbf16>
    %140 = vector.extract_strided_slice %20 {offsets = [8, 0], sizes = [8, 32], strides = [1, 1]} : vector<32x32xbf16> to vector<8x32xbf16>
    %cst_48 = arith.constant dense<0.000000e+00> : vector<8x32xf32>
    %141 = tpu.matmul %139, %140, %cst_48 {dimension_numbers = #tpu.dot_dimension_numbers<[1], [0], [0], [1], [0, 0, 1, 1], [], []>} : vector<8x8xbf16>, vector<8x32xbf16>, vector<8x32xf32> -> vector<8x32xf32>
    %142 = arith.addf %123, %141 : vector<8x32xf32>
    %143 = vector.extract_strided_slice %101 {offsets = [0, 16], sizes = [8, 8], strides = [1, 1]} : vector<8x32xbf16> to vector<8x8xbf16>
    %144 = vector.extract_strided_slice %102 {offsets = [0, 16], sizes = [8, 8], strides = [1, 1]} : vector<8x32xbf16> to vector<8x8xbf16>
    %145 = vector.extract_strided_slice %103 {offsets = [0, 16], sizes = [8, 8], strides = [1, 1]} : vector<8x32xbf16> to vector<8x8xbf16>
    %cst_49 = arith.constant dense<0.000000e+00> : vector<8x8xf32>
    %146 = tpu.matmul %143, %144, %cst_49 {dimension_numbers = #tpu.dot_dimension_numbers<[1], [1], [0], [0], [0, 0, 1, 0], [], []>} : vector<8x8xbf16>, vector<8x8xbf16>, vector<8x8xf32> -> vector<8x8xf32>
    %cst_50 = arith.constant dense<0xFF800000> : vector<8xf32>
    %147 = vector.multi_reduction <maximumf>, %146, %cst_50 [1] : vector<8x8xf32> to vector<8xf32>
    %148 = vector.shape_cast %147 : vector<8xf32> to vector<8x1xf32>
    %149 = vector.broadcast %148 : vector<8x1xf32> to vector<8x8xf32>
    %150 = arith.subf %146, %149 : vector<8x8xf32>
    %151 = math.exp %150 : vector<8x8xf32>
    %cst_51 = arith.constant dense<0.000000e+00> : vector<8xf32>
    %152 = vector.multi_reduction <add>, %151, %cst_51 [1] : vector<8x8xf32> to vector<8xf32>
    %153 = vector.shape_cast %152 : vector<8xf32> to vector<8x1xf32>
    %154 = vector.broadcast %153 : vector<8x1xf32> to vector<8x8xf32>
    %155 = arith.divf %151, %154 : vector<8x8xf32>
    %156 = arith.truncf %155 : vector<8x8xf32> to vector<8x8xbf16>
    %cst_52 = arith.constant dense<0.000000e+00> : vector<8x8xf32>
    %157 = tpu.matmul %156, %145, %cst_52 {dimension_numbers = #tpu.dot_dimension_numbers<[1], [0], [0], [1], [0, 0, 1, 1], [], []>} : vector<8x8xbf16>, vector<8x8xbf16>, vector<8x8xf32> -> vector<8x8xf32>
    %158 = arith.truncf %157 : vector<8x8xf32> to vector<8x8xbf16>
    %159 = vector.extract_strided_slice %20 {offsets = [16, 0], sizes = [8, 32], strides = [1, 1]} : vector<32x32xbf16> to vector<8x32xbf16>
    %cst_53 = arith.constant dense<0.000000e+00> : vector<8x32xf32>
    %160 = tpu.matmul %158, %159, %cst_53 {dimension_numbers = #tpu.dot_dimension_numbers<[1], [0], [0], [1], [0, 0, 1, 1], [], []>} : vector<8x8xbf16>, vector<8x32xbf16>, vector<8x32xf32> -> vector<8x32xf32>
    %161 = arith.addf %142, %160 : vector<8x32xf32>
    %162 = vector.extract_strided_slice %101 {offsets = [0, 24], sizes = [8, 8], strides = [1, 1]} : vector<8x32xbf16> to vector<8x8xbf16>
    %163 = vector.extract_strided_slice %102 {offsets = [0, 24], sizes = [8, 8], strides = [1, 1]} : vector<8x32xbf16> to vector<8x8xbf16>
    %164 = vector.extract_strided_slice %103 {offsets = [0, 24], sizes = [8, 8], strides = [1, 1]} : vector<8x32xbf16> to vector<8x8xbf16>
    %cst_54 = arith.constant dense<0.000000e+00> : vector<8x8xf32>
    %165 = tpu.matmul %162, %163, %cst_54 {dimension_numbers = #tpu.dot_dimension_numbers<[1], [1], [0], [0], [0, 0, 1, 0], [], []>} : vector<8x8xbf16>, vector<8x8xbf16>, vector<8x8xf32> -> vector<8x8xf32>
    %cst_55 = arith.constant dense<0xFF800000> : vector<8xf32>
    %166 = vector.multi_reduction <maximumf>, %165, %cst_55 [1] : vector<8x8xf32> to vector<8xf32>
    %167 = vector.shape_cast %166 : vector<8xf32> to vector<8x1xf32>
    %168 = vector.broadcast %167 : vector<8x1xf32> to vector<8x8xf32>
    %169 = arith.subf %165, %168 : vector<8x8xf32>
    %170 = math.exp %169 : vector<8x8xf32>
    %cst_56 = arith.constant dense<0.000000e+00> : vector<8xf32>
    %171 = vector.multi_reduction <add>, %170, %cst_56 [1] : vector<8x8xf32> to vector<8xf32>
    %172 = vector.shape_cast %171 : vector<8xf32> to vector<8x1xf32>
    %173 = vector.broadcast %172 : vector<8x1xf32> to vector<8x8xf32>
    %174 = arith.divf %170, %173 : vector<8x8xf32>
    %175 = arith.truncf %174 : vector<8x8xf32> to vector<8x8xbf16>
    %cst_57 = arith.constant dense<0.000000e+00> : vector<8x8xf32>
    %176 = tpu.matmul %175, %164, %cst_57 {dimension_numbers = #tpu.dot_dimension_numbers<[1], [0], [0], [1], [0, 0, 1, 1], [], []>} : vector<8x8xbf16>, vector<8x8xbf16>, vector<8x8xf32> -> vector<8x8xf32>
    %177 = arith.truncf %176 : vector<8x8xf32> to vector<8x8xbf16>
    %178 = vector.extract_strided_slice %20 {offsets = [24, 0], sizes = [8, 32], strides = [1, 1]} : vector<32x32xbf16> to vector<8x32xbf16>
    %cst_58 = arith.constant dense<0.000000e+00> : vector<8x32xf32>
    %179 = tpu.matmul %177, %178, %cst_58 {dimension_numbers = #tpu.dot_dimension_numbers<[1], [0], [0], [1], [0, 0, 1, 1], [], []>} : vector<8x8xbf16>, vector<8x32xbf16>, vector<8x32xf32> -> vector<8x32xf32>
    %180 = arith.addf %161, %179 : vector<8x32xf32>
    %181 = tpu.concatenate %100, %180 in 0 : vector<8x32xf32>, vector<8x32xf32> -> vector<16x32xf32>
    %c0_59 = arith.constant 0 : index
    %c0_60 = arith.constant 0 : index
    %182 = vector.load %arg9[%c0_59, %c0_60] : memref<1x32xf32, #tpu.memory_space<vmem>>, vector<1x32xf32>
    %183 = vector.broadcast %182 : vector<1x32xf32> to vector<16x32xf32>
    %184 = arith.addf %181, %183 : vector<16x32xf32>
    %185 = arith.addf %0, %184 : vector<16x32xf32>
    %cst_61 = arith.constant dense<0.000000e+00> : vector<16xf32>
    %186 = vector.multi_reduction <add>, %185, %cst_61 [1] : vector<16x32xf32> to vector<16xf32>
    %187 = vector.shape_cast %186 : vector<16xf32> to vector<16x1xf32>
    %cst_62 = arith.constant 3.200000e+01 : f32
    %188 = vector.broadcast %cst_62 : f32 to vector<16x1xf32>
    %189 = arith.divf %187, %188 : vector<16x1xf32>
    %190 = vector.broadcast %189 : vector<16x1xf32> to vector<16x32xf32>
    %191 = arith.subf %185, %190 : vector<16x32xf32>
    %192 = arith.mulf %191, %191 : vector<16x32xf32>
    %cst_63 = arith.constant dense<0.000000e+00> : vector<16xf32>
    %193 = vector.multi_reduction <add>, %192, %cst_63 [1] : vector<16x32xf32> to vector<16xf32>
    %194 = vector.shape_cast %193 : vector<16xf32> to vector<16x1xf32>
    %cst_64 = arith.constant 3.200000e+01 : f32
    %195 = vector.broadcast %cst_64 : f32 to vector<16x1xf32>
    %196 = arith.divf %194, %195 : vector<16x1xf32>
    %197 = vector.broadcast %189 : vector<16x1xf32> to vector<16x32xf32>
    %198 = arith.subf %185, %197 : vector<16x32xf32>
    %cst_65 = arith.constant 9.99999974E-6 : f32
    %199 = vector.broadcast %cst_65 : f32 to vector<16x1xf32>
    %200 = arith.addf %196, %199 : vector<16x1xf32>
    %201 = math.rsqrt %200 : vector<16x1xf32>
    %202 = vector.broadcast %201 : vector<16x1xf32> to vector<16x32xf32>
    %203 = arith.mulf %198, %202 : vector<16x32xf32>
    %c0_66 = arith.constant 0 : index
    %c0_67 = arith.constant 0 : index
    %204 = vector.load %arg10[%c0_66, %c0_67] : memref<1x32xf32, #tpu.memory_space<vmem>>, vector<1x32xf32>
    %205 = vector.broadcast %204 : vector<1x32xf32> to vector<16x32xf32>
    %206 = arith.mulf %203, %205 : vector<16x32xf32>
    %c0_68 = arith.constant 0 : index
    %c0_69 = arith.constant 0 : index
    %207 = vector.load %arg11[%c0_68, %c0_69] : memref<1x32xf32, #tpu.memory_space<vmem>>, vector<1x32xf32>
    %208 = vector.broadcast %207 : vector<1x32xf32> to vector<16x32xf32>
    %209 = arith.addf %206, %208 : vector<16x32xf32>
    %210 = arith.truncf %209 : vector<16x32xf32> to vector<16x32xbf16>
    %c0_70 = arith.constant 0 : index
    %c0_71 = arith.constant 0 : index
    %211 = vector.load %arg12[%c0_70, %c0_71] : memref<32x64xbf16, #tpu.memory_space<vmem>>, vector<32x64xbf16>
    %cst_72 = arith.constant dense<0.000000e+00> : vector<16x64xf32>
    %212 = tpu.matmul %210, %211, %cst_72 {dimension_numbers = #tpu.dot_dimension_numbers<[1], [0], [0], [1], [0, 0, 1, 1], [], []>} : vector<16x32xbf16>, vector<32x64xbf16>, vector<16x64xf32> -> vector<16x64xf32>
    %c0_73 = arith.constant 0 : index
    %c0_74 = arith.constant 0 : index
    %213 = vector.load %arg13[%c0_73, %c0_74] : memref<1x64xf32, #tpu.memory_space<vmem>>, vector<1x64xf32>
    %214 = vector.broadcast %213 : vector<1x64xf32> to vector<16x64xf32>
    %215 = arith.addf %212, %214 : vector<16x64xf32>
    %cst_75 = arith.constant 0.000000e+00 : f32
    %216 = vector.broadcast %cst_75 : f32 to vector<16x64xf32>
    %217 = arith.maximumf %215, %216 : vector<16x64xf32>
    %218 = arith.truncf %217 : vector<16x64xf32> to vector<16x64xbf16>
    %c0_76 = arith.constant 0 : index
    %c0_77 = arith.constant 0 : index
    %219 = vector.load %arg14[%c0_76, %c0_77] : memref<64x32xbf16, #tpu.memory_space<vmem>>, vector<64x32xbf16>
    %cst_78 = arith.constant dense<0.000000e+00> : vector<16x32xf32>
    %220 = tpu.matmul %218, %219, %cst_78 {dimension_numbers = #tpu.dot_dimension_numbers<[1], [0], [0], [1], [0, 0, 1, 1], [], []>} : vector<16x64xbf16>, vector<64x32xbf16>, vector<16x32xf32> -> vector<16x32xf32>
    %c0_79 = arith.constant 0 : index
    %c0_80 = arith.constant 0 : index
    %221 = vector.load %arg15[%c0_79, %c0_80] : memref<1x32xf32, #tpu.memory_space<vmem>>, vector<1x32xf32>
    %222 = vector.broadcast %221 : vector<1x32xf32> to vector<16x32xf32>
    %223 = arith.addf %220, %222 : vector<16x32xf32>
    %224 = arith.addf %209, %223 : vector<16x32xf32>
    %cst_81 = arith.constant dense<0.000000e+00> : vector<16xf32>
    %225 = vector.multi_reduction <add>, %224, %cst_81 [1] : vector<16x32xf32> to vector<16xf32>
    %226 = vector.shape_cast %225 : vector<16xf32> to vector<16x1xf32>
    %cst_82 = arith.constant 3.200000e+01 : f32
    %227 = vector.broadcast %cst_82 : f32 to vector<16x1xf32>
    %228 = arith.divf %226, %227 : vector<16x1xf32>
    %229 = vector.broadcast %228 : vector<16x1xf32> to vector<16x32xf32>
    %230 = arith.subf %224, %229 : vector<16x32xf32>
    %231 = arith.mulf %230, %230 : vector<16x32xf32>
    %cst_83 = arith.constant dense<0.000000e+00> : vector<16xf32>
    %232 = vector.multi_reduction <add>, %231, %cst_83 [1] : vector<16x32xf32> to vector<16xf32>
    %233 = vector.shape_cast %232 : vector<16xf32> to vector<16x1xf32>
    %cst_84 = arith.constant 3.200000e+01 : f32
    %234 = vector.broadcast %cst_84 : f32 to vector<16x1xf32>
    %235 = arith.divf %233, %234 : vector<16x1xf32>
    %236 = vector.broadcast %228 : vector<16x1xf32> to vector<16x32xf32>
    %237 = arith.subf %224, %236 : vector<16x32xf32>
    %cst_85 = arith.constant 9.99999974E-6 : f32
    %238 = vector.broadcast %cst_85 : f32 to vector<16x1xf32>
    %239 = arith.addf %235, %238 : vector<16x1xf32>
    %240 = math.rsqrt %239 : vector<16x1xf32>
    %241 = vector.broadcast %240 : vector<16x1xf32> to vector<16x32xf32>
    %242 = arith.mulf %237, %241 : vector<16x32xf32>
    %c0_86 = arith.constant 0 : index
    %c0_87 = arith.constant 0 : index
    %243 = vector.load %arg16[%c0_86, %c0_87] : memref<1x32xf32, #tpu.memory_space<vmem>>, vector<1x32xf32>
    %244 = vector.broadcast %243 : vector<1x32xf32> to vector<16x32xf32>
    %245 = arith.mulf %242, %244 : vector<16x32xf32>
    %c0_88 = arith.constant 0 : index
    %c0_89 = arith.constant 0 : index
    %246 = vector.load %arg17[%c0_88, %c0_89] : memref<1x32xf32, #tpu.memory_space<vmem>>, vector<1x32xf32>
    %247 = vector.broadcast %246 : vector<1x32xf32> to vector<16x32xf32>
    %248 = arith.addf %245, %247 : vector<16x32xf32>
    %c0_90 = arith.constant 0 : index
    %c0_91 = arith.constant 0 : index
    %249 = vector.load %arg18[%c0_90, %c0_91] : memref<16x32xf32, #tpu.memory_space<vmem>>, vector<16x32xf32>
    tpu.vector_store %arg18[%c0_90, %c0_91], %248 {strides = array<i32>} : memref<16x32xf32, #tpu.memory_space<vmem>>, vector<16x32xf32>,
    return
  }
  func.func @transform_0(%arg0: i32) -> (i32, i32) {
    %c0_i32 = arith.constant 0 : i32
    %c0_i32_0 = arith.constant 0 : i32
    %c0_i32_1 = arith.constant 0 : i32
    return %c0_i32, %c0_i32_0 : i32, i32
  }
  func.func @transform_1(%arg0: i32) -> (i32, i32) {
    %c0_i32 = arith.constant 0 : i32
    %c0_i32_0 = arith.constant 0 : i32
    %c0_i32_1 = arith.constant 0 : i32
    return %c0_i32, %c0_i32_0 : i32, i32
  }
  func.func @transform_2(%arg0: i32) -> (i32, i32) {
    %c0_i32 = arith.constant 0 : i32
    %c0_i32_0 = arith.constant 0 : i32
    %c0_i32_1 = arith.constant 0 : i32
    return %c0_i32, %c0_i32_0 : i32, i32
  }
  func.func @transform_3(%arg0: i32) -> (i32, i32) {
    %c0_i32 = arith.constant 0 : i32
    %c0_i32_0 = arith.constant 0 : i32
    %c0_i32_1 = arith.constant 0 : i32
    return %c0_i32, %c0_i32_0 : i32, i32
  }
  func.func @transform_4(%arg0: i32) -> (i32, i32) {
    %c0_i32 = arith.constant 0 : i32
    %c0_i32_0 = arith.constant 0 : i32
    %c0_i32_1 = arith.constant 0 : i32
    return %c0_i32, %c0_i32_0 : i32, i32
  }
  func.func @transform_5(%arg0: i32) -> (i32, i32) {
    %c0_i32 = arith.constant 0 : i32
    %c0_i32_0 = arith.constant 0 : i32
    %c0_i32_1 = arith.constant 0 : i32
    return %c0_i32, %c0_i32_0 : i32, i32
  }
  func.func @transform_6(%arg0: i32) -> (i32, i32) {
    %c0_i32 = arith.constant 0 : i32
    %c0_i32_0 = arith.constant 0 : i32
    %c0_i32_1 = arith.constant 0 : i32
    return %c0_i32, %c0_i32_0 : i32, i32
  }
  func.func @transform_7(%arg0: i32) -> (i32, i32) {
    %c0_i32 = arith.constant 0 : i32
    %c0_i32_0 = arith.constant 0 : i32
    %c0_i32_1 = arith.constant 0 : i32
    return %c0_i32, %c0_i32_0 : i32, i32
  }
  func.func @transform_8(%arg0: i32) -> (i32, i32) {
    %c0_i32 = arith.constant 0 : i32
    %c0_i32_0 = arith.constant 0 : i32
    %c0_i32_1 = arith.constant 0 : i32
    return %c0_i32, %c0_i32_0 : i32, i32
  }
  func.func @transform_9(%arg0: i32) -> (i32, i32) {
    %c0_i32 = arith.constant 0 : i32
    %c0_i32_0 = arith.constant 0 : i32
    %c0_i32_1 = arith.constant 0 : i32
    return %c0_i32, %c0_i32_0 : i32, i32
  }
  func.func @transform_10(%arg0: i32) -> (i32, i32) {
    %c0_i32 = arith.constant 0 : i32
    %c0_i32_0 = arith.constant 0 : i32
    %c0_i32_1 = arith.constant 0 : i32
    return %c0_i32, %c0_i32_0 : i32, i32
  }
  func.func @transform_11(%arg0: i32) -> (i32, i32) {
    %c0_i32 = arith.constant 0 : i32
    %c0_i32_0 = arith.constant 0 : i32
    %c0_i32_1 = arith.constant 0 : i32
    return %c0_i32, %c0_i32_0 : i32, i32
  }
  func.func @transform_12(%arg0: i32) -> (i32, i32) {
    %c0_i32 = arith.constant 0 : i32
    %c0_i32_0 = arith.constant 0 : i32
    %c0_i32_1 = arith.constant 0 : i32
    return %c0_i32, %c0_i32_0 : i32, i32
  }
  func.func @transform_13(%arg0: i32) -> (i32, i32) {
    %c0_i32 = arith.constant 0 : i32
    %c0_i32_0 = arith.constant 0 : i32
    %c0_i32_1 = arith.constant 0 : i32
    return %c0_i32, %c0_i32_0 : i32, i32
  }
  func.func @transform_14(%arg0: i32) -> (i32, i32) {
    %c0_i32 = arith.constant 0 : i32
    %c0_i32_0 = arith.constant 0 : i32
    %c0_i32_1 = arith.constant 0 : i32
    return %c0_i32, %c0_i32_0 : i32, i32
  }
  func.func @transform_15(%arg0: i32) -> (i32, i32) {
    %c0_i32 = arith.constant 0 : i32
    %c0_i32_0 = arith.constant 0 : i32
    %c0_i32_1 = arith.constant 0 : i32
    return %c0_i32, %c0_i32_0 : i32, i32
  }
  func.func @transform_16(%arg0: i32) -> (i32, i32) {
    %c0_i32 = arith.constant 0 : i32
    %c0_i32_0 = arith.constant 0 : i32
    %c0_i32_1 = arith.constant 0 : i32
    return %c0_i32, %c0_i32_0 : i32, i32
  }
  func.func @transform_17(%arg0: i32) -> (i32, i32) {
    %c0_i32 = arith.constant 0 : i32
    %c0_i32_0 = arith.constant 0 : i32
    %c0_i32_1 = arith.constant 0 : i32
    return %c0_i32, %c0_i32_0 : i32, i32
  }
}

</mosaic_0001>

<llo_original>
// kernel: tpu_custom_call.1
$region0: #{tpu_custom_call.1}
  #allocation0 [shape = 'u32[]', space=smem, size = 0x4, offset = 0x4, fixed_abs, tag = 'smem constant byte address 0x4 - core index']
  #allocation1 [shape = 'u32[144,128]{1,0:T(1,128)}', space=vmem, size = 0x12000, scoped, tag = 'internal scratch']
  %s0 = inlined_call_operand.vmem [shape: f32[16,32], index: 0, kind: input, shape index: {}]
  %s1 = inlined_call_operand.vmem [shape: bf16[32,32], index: 1, kind: input, shape index: {}]
  %s2 = inlined_call_operand.vmem [shape: f32[1,32], index: 2, kind: input, shape index: {}]
  %s3 = inlined_call_operand.vmem [shape: bf16[32,32], index: 3, kind: input, shape index: {}]
  %s4 = inlined_call_operand.vmem [shape: f32[1,32], index: 4, kind: input, shape index: {}]
  %s5 = inlined_call_operand.hbm [shape: bf16[32,32], index: 5, kind: input, shape index: {}]
  %s6 = inlined_call_operand.hbm [shape: f32[1,32], index: 6, kind: input, shape index: {}]
  %s7 = inlined_call_operand.hbm [shape: bf16[32,32], index: 7, kind: input, shape index: {}]
  %s8 = inlined_call_operand.hbm [shape: f32[1,32], index: 8, kind: input, shape index: {}]
  %s9 = inlined_call_operand.hbm [shape: f32[1,32], index: 9, kind: input, shape index: {}]
  %s10 = inlined_call_operand.vmem [shape: f32[1,32], index: 10, kind: input, shape index: {}]
  %s11 = inlined_call_operand.vmem [shape: bf16[32,64], index: 11, kind: input, shape index: {}]
  %s12 = inlined_call_operand.vmem [shape: f32[1,64], index: 12, kind: input, shape index: {}]
  %s13 = inlined_call_operand.vmem [shape: bf16[64,32], index: 13, kind: input, shape index: {}]
  %s14 = inlined_call_operand.vmem [shape: f32[1,32], index: 14, kind: input, shape index: {}]
  %s15 = inlined_call_operand.vmem [shape: f32[1,32], index: 15, kind: input, shape index: {}]
  %s16 = inlined_call_operand.vmem [shape: f32[1,32], index: 16, kind: input, shape index: {}]
  %s17 = inlined_call_operand.hbm [shape: f32[16,32], index: 17, kind: output, shape index: {}]
  %s18 = sld [smem:[#allocation0]]
  $region98: #{tpu_custom_call.1} parent=0
    _
  %s20 = ssub.s32 1, %s18
  %s21 = scalar_select 0, %s20, %s18
  $region1: #{tpu_custom_call.1} parent=0
    #allocation2 [shape = 'u8[8192]{0}', space=vmem, size = 0x2000, scoped, tag = 'input window, operand 5, single buffered']
    #allocation3 [shape = 's32[1]{0}', space=sflag, size = 0x4, scoped, tag = 'scoped memory for tpu_custom_call.1']
    #allocation4 [shape = 's32[1]{0}', space=sflag, size = 0x4, scoped, tag = 'scoped memory for tpu_custom_call.1']
    #allocation5 [shape = 'u8[512]{0}', space=vmem, size = 0x400, scoped, tag = 'input window, operand 6, single buffered']
    #allocation6 [shape = 's32[1]{0}', space=sflag, size = 0x4, scoped, tag = 'scoped memory for tpu_custom_call.1']
    #allocation7 [shape = 'u8[8192]{0}', space=vmem, size = 0x2000, scoped, tag = 'input window, operand 7, single buffered']
    #allocation8 [shape = 'u8[512]{0}', space=vmem, size = 0x400, scoped, tag = 'input window, operand 8, single buffered']
    #allocation9 [shape = 's32[1]{0}', space=sflag, size = 0x4, scoped, tag = 'scoped memory for tpu_custom_call.1']
    #allocation10 [shape = 'u8[512]{0}', space=vmem, size = 0x400, scoped, tag = 'input window, operand 9, single buffered']
    #allocation11 [shape = 'u8[8192]{0}', space=vmem, size = 0x2000, scoped, tag = 'output window, operand 0, single buffered']
    %22 = vsyncpa [#allocation3], 0
    %23 = vsyncpa [#allocation6], 0
    %24 = vsyncpa [#allocation9], 0
    %25 = vsyncpa [#allocation4], 0
    // Predicated region
    $region2: #{tpu_custom_call.1} parent=1 // pred_check
      _
    $region3: #{tpu_custom_call.1} parent=1 // pred_check_branch
      %27 = sbr.rel (0) target = $region5
    $region4: #{tpu_custom_call.1} parent=1 // pred_region
      _
    $region5: #{tpu_custom_call.1} parent=1 // pred_fallthru
      _
    // Predicated region
    $region6: #{tpu_custom_call.1} parent=1 // pred_check
      _
    $region7: #{tpu_custom_call.1} parent=1 // pred_check_branch
      %29 = sbr.rel (0) target = $region9
    $region8: #{tpu_custom_call.1} parent=1 // pred_region
      _
    $region9: #{tpu_custom_call.1} parent=1 // pred_fallthru
      _
    // Predicated region
    $region10: #{tpu_custom_call.1} parent=1 // pred_check
      _
    $region11: #{tpu_custom_call.1} parent=1 // pred_check_branch
      %31 = sbr.rel (0) target = $region13
    $region12: #{tpu_custom_call.1} parent=1 // pred_region
      _
    $region13: #{tpu_custom_call.1} parent=1 // pred_fallthru
      _
    // Predicated region
    $region14: #{tpu_custom_call.1} parent=1 // pred_check
      _
    $region15: #{tpu_custom_call.1} parent=1 // pred_check_branch
      %33 = sbr.rel (0) target = $region17
    $region16: #{tpu_custom_call.1} parent=1 // pred_region
      _
    $region17: #{tpu_custom_call.1} parent=1 // pred_fallthru
      _
    // Predicated region
    $region18: #{tpu_custom_call.1} parent=1 // pred_check
      _
    $region19: #{tpu_custom_call.1} parent=1 // pred_check_branch
      %35 = sbr.rel (0) target = $region21
    $region20: #{tpu_custom_call.1} parent=1 // pred_region
      _
    $region21: #{tpu_custom_call.1} parent=1 // pred_fallthru
      _
    // Predicated region
    $region22: #{tpu_custom_call.1} parent=1 // pred_check
      _
    $region23: #{tpu_custom_call.1} parent=1 // pred_check_branch
      %37 = sbr.rel (0) target = $region25
    $region24: #{tpu_custom_call.1} parent=1 // pred_region
      %s39 = ssub.s32 256, 256
      %40 = vsyncadd [#allocation3], %s39
      %s41 = sshll.u32 [#allocation2], 4
      %s42 = int_to_ptr.vmem [resolvable:$true] %s41
      %47 = dma.hbm_to_vmem [thread:$0]  %s5, 256, %s42, [#allocation3], 64, 64, 4
    $region25: #{tpu_custom_call.1} parent=1 // pred_fallthru
      _
    // Predicated region
    $region26: #{tpu_custom_call.1} parent=1 // pred_check
      _
    $region27: #{tpu_custom_call.1} parent=1 // pred_check_branch
      %49 = sbr.rel (0) target = $region29
    $region28: #{tpu_custom_call.1} parent=1 // pred_region
      %s51 = ssub.s32 16, 16
      %52 = vsyncadd [#allocation6], %s51
      %s54 = sshll.u32 [#allocation5], 4
      %s55 = int_to_ptr.vmem [resolvable:$true] %s54
      %57 = dma.hbm_to_vmem [thread:$0]  %s6, 16, %s55, [#allocation6]
    $region29: #{tpu_custom_call.1} parent=1 // pred_fallthru
      _
    // Predicated region
    $region30: #{tpu_custom_call.1} parent=1 // pred_check
      _
    $region31: #{tpu_custom_call.1} parent=1 // pred_check_branch
      %59 = sbr.rel (0) target = $region33
    $region32: #{tpu_custom_call.1} parent=1 // pred_region
      %s61 = ssub.s32 256, 256
      %62 = vsyncadd [#allocation6], %s61
      %s63 = sshll.u32 [#allocation7], 4
      %s64 = int_to_ptr.vmem [resolvable:$true] %s63
      %69 = dma.hbm_to_vmem [thread:$0]  %s7, 256, %s64, [#allocation6], 64, 64, 4
    $region33: #{tpu_custom_call.1} parent=1 // pred_fallthru
      _
    // Predicated region
    $region34: #{tpu_custom_call.1} parent=1 // pred_check
      _
    $region35: #{tpu_custom_call.1} parent=1 // pred_check_branch
      %71 = sbr.rel (0) target = $region37
    $region36: #{tpu_custom_call.1} parent=1 // pred_region
      %s73 = ssub.s32 16, 16
      %74 = vsyncadd [#allocation9], %s73
      %s76 = sshll.u32 [#allocation8], 4
      %s77 = int_to_ptr.vmem [resolvable:$true] %s76
      %79 = dma.hbm_to_vmem [thread:$0]  %s8, 16, %s77, [#allocation9]
    $region37: #{tpu_custom_call.1} parent=1 // pred_fallthru
      _
    // Predicated region
    $region38: #{tpu_custom_call.1} parent=1 // pred_check
      _
    $region39: #{tpu_custom_call.1} parent=1 // pred_check_branch
      %81 = sbr.rel (0) target = $region41
    $region40: #{tpu_custom_call.1} parent=1 // pred_region
      %s83 = ssub.s32 16, 16
      %84 = vsyncadd [#allocation9], %s83
      %s86 = sshll.u32 [#allocation10], 4
      %s87 = int_to_ptr.vmem [resolvable:$true] %s86
      %89 = dma.hbm_to_vmem [thread:$0]  %s9, 16, %s87, [#allocation9]
    $region41: #{tpu_custom_call.1} parent=1 // pred_fallthru
      _
    // Predicated region
    $region42: #{tpu_custom_call.1} parent=1 // pred_check
      _
    $region43: #{tpu_custom_call.1} parent=1 // pred_check_branch
      %91 = sbr.rel (0) target = $region45
    $region44: #{tpu_custom_call.1} parent=1 // pred_region
      _
    $region45: #{tpu_custom_call.1} parent=1 // pred_fallthru
      _
    // Predicated region
    $region46: #{tpu_custom_call.1} parent=1 // pred_check
      _
    $region47: #{tpu_custom_call.1} parent=1 // pred_check_branch
      %93 = sbr.rel (0) target = $region49
    $region48: #{tpu_custom_call.1} parent=1 // pred_region
      _
    $region49: #{tpu_custom_call.1} parent=1 // pred_fallthru
      _
    // Predicated region
    $region50: #{tpu_custom_call.1} parent=1 // pred_check
      _
    $region51: #{tpu_custom_call.1} parent=1 // pred_check_branch
      %95 = sbr.rel (0) target = $region53
    $region52: #{tpu_custom_call.1} parent=1 // pred_region
      _
    $region53: #{tpu_custom_call.1} parent=1 // pred_fallthru
      _
    // Predicated region
    $region54: #{tpu_custom_call.1} parent=1 // pred_check
      _
    $region55: #{tpu_custom_call.1} parent=1 // pred_check_branch
      %97 = sbr.rel (0) target = $region57
    $region56: #{tpu_custom_call.1} parent=1 // pred_region
      _
    $region57: #{tpu_custom_call.1} parent=1 // pred_fallthru
      _
    // Predicated region
    $region58: #{tpu_custom_call.1} parent=1 // pred_check
      _
    $region59: #{tpu_custom_call.1} parent=1 // pred_check_branch
      %99 = sbr.rel (0) target = $region61
    $region60: #{tpu_custom_call.1} parent=1 // pred_region
      _
    $region61: #{tpu_custom_call.1} parent=1 // pred_fallthru
      _
    // Predicated region
    $region62: #{tpu_custom_call.1} parent=1 // pred_check
      _
    $region63: #{tpu_custom_call.1} parent=1 // pred_check_branch
      %101 = sbr.rel (0) target = $region65
    $region64: #{tpu_custom_call.1} parent=1 // pred_region
      _
    $region65: #{tpu_custom_call.1} parent=1 // pred_fallthru
      _
    // Predicated region
    $region66: #{tpu_custom_call.1} parent=1 // pred_check
      _
    $region67: #{tpu_custom_call.1} parent=1 // pred_check_branch
      %103 = sbr.rel (0) target = $region69
    $region68: #{tpu_custom_call.1} parent=1 // pred_region
      _
    $region69: #{tpu_custom_call.1} parent=1 // pred_fallthru
      _
    // Predicated region
    $region70: #{tpu_custom_call.1} parent=1 // pred_check
      _
    $region71: #{tpu_custom_call.1} parent=1 // pred_check_branch
      %105 = sbr.rel (0) target = $region73
    $region72: #{tpu_custom_call.1} parent=1 // pred_region
      %106 = dma.done [#allocation3], 256
    $region73: #{tpu_custom_call.1} parent=1 // pred_fallthru
      _
    // Predicated region
    $region74: #{tpu_custom_call.1} parent=1 // pred_check
      _
    $region75: #{tpu_custom_call.1} parent=1 // pred_check_branch
      %108 = sbr.rel (0) target = $region77
    $region76: #{tpu_custom_call.1} parent=1 // pred_region
      %109 = dma.done [#allocation6], 16
    $region77: #{tpu_custom_call.1} parent=1 // pred_fallthru
      _
    // Predicated region
    $region78: #{tpu_custom_call.1} parent=1 // pred_check
      _
    $region79: #{tpu_custom_call.1} parent=1 // pred_check_branch
      %111 = sbr.rel (0) target = $region81
    $region80: #{tpu_custom_call.1} parent=1 // pred_region
      %112 = dma.done [#allocation6], 256
    $region81: #{tpu_custom_call.1} parent=1 // pred_fallthru
      _
    // Predicated region
    $region82: #{tpu_custom_call.1} parent=1 // pred_check
      _
    $region83: #{tpu_custom_call.1} parent=1 // pred_check_branch
      %114 = sbr.rel (0) target = $region85
    $region84: #{tpu_custom_call.1} parent=1 // pred_region
      %115 = dma.done [#allocation9], 16
    $region85: #{tpu_custom_call.1} parent=1 // pred_fallthru
      _
    // Predicated region
    $region86: #{tpu_custom_call.1} parent=1 // pred_check
      _
    $region87: #{tpu_custom_call.1} parent=1 // pred_check_branch
      %117 = sbr.rel (0) target = $region89
    $region88: #{tpu_custom_call.1} parent=1 // pred_region
      %118 = dma.done [#allocation9], 16
    $region89: #{tpu_custom_call.1} parent=1 // pred_fallthru
      _
    %v120 = vld [vmem:[%s0] sm:$0xff]
    %v121 = vld [vmem:[%s0 + $0x8] sm:$0xff]
    %v122 = vpack.c.bf16 %v121, %v120
    %v123 = vld [vmem:[%s1] sm:$0xf]
    %v124 = vld [vmem:[%s1 + $0x4] sm:$0xf]
    %v125 = vld [vmem:[%s1 + $0x8] sm:$0xf]
    %v126 = vld [vmem:[%s1 + $0xc] sm:$0xf]
    %v127 = vld [vmem:[%s2] sm:$0x1]
    %v129 = vlaneseq
    %v130 = vshrl.u32 %v129, 7
    %v131 = vsub.s32 0, %v130
    %v132 = vrot.slane %v127, %v131
    %v138 = vunpack.c.l.b16 %v123
    %v139 = vunpack.c.l.b16 %v124
    %v140 = vunpack.c.l.b16 %v125
    %v141 = vunpack.c.l.b16 %v126
    %v142 = vpack.c.b16 %v139, %v138
    %v143 = vpack.c.b16 %v141, %v140
    %vm146 = vcmask 261120
    %v148 = vsel %vm146, %v122, 0
    %150 = vmatprep.subr.bf16.mxu0 0
    %151 = vmatpush1.bf16.msra.mxu0 %v142
    %152 = vmatprep.subr.bf16.mxu0 0
    %153 = vmatpush1.bf16.msra.mxu0 %v143
    %154 = vmatprep.subr.bf16.mxu0 0
    %155 = vmatpush1.bf16.msra.mxu0 0
    %156 = vmatprep.subr.bf16.mxu0 0
    %157 = vmatpush1.bf16.msra.mxu0 0
    %158 = vmatprep.subr.bf16.mxu0 0
    %159 = vmatpush1.bf16.msra.mxu0 0
    %160 = vmatprep.subr.bf16.mxu0 0
    %161 = vmatpush1.bf16.msra.mxu0 0
    %162 = vmatprep.subr.bf16.mxu0 0
    %163 = vmatpush1.bf16.msra.mxu0 0
    %164 = vmatprep.subr.bf16.mxu0 0
    %165 = vmatpush1.bf16.msra.mxu0 0
    %166 = vmatprep.subr.bf16.mxu0 0
    %167 = vmatpush1.bf16.msra.mxu0 0
    %168 = vmatprep.subr.bf16.mxu0 0
    %169 = vmatpush1.bf16.msra.mxu0 0
    %170 = vmatprep.subr.bf16.mxu0 0
    %171 = vmatpush1.bf16.msra.mxu0 0
    %172 = vmatprep.subr.bf16.mxu0 0
    %173 = vmatpush1.bf16.msra.mxu0 0
    %174 = vmatprep.subr.bf16.mxu0 0
    %175 = vmatpush1.bf16.msra.mxu0 0
    %176 = vmatprep.subr.bf16.mxu0 0
    %177 = vmatpush1.bf16.msra.mxu0 0
    %178 = vmatprep.subr.bf16.mxu0 0
    %179 = vmatpush1.bf16.msra.mxu0 0
    %180 = vmatprep.subr.bf16.mxu0 0
    %181 = vmatpush1.bf16.msra.mxu0 0
    %182 = vmatprep.mubr.bf16.mxu0 0
    %183 = vmatmul.mubr.bf16.gmra.mrb[0].mxu0 %v148
    %v184 = vpop.f32.mrb[0].mxu0
    %v185 = vadd.f32 %v132, %v184
    %v186 = vpop.f32.mrb[0].mxu0
    %v187 = vpop.f32.mrb[0].mxu0
    %v188 = vadd.f32 %v132, %v187
    %v189 = vpop.f32.mrb[0].mxu0
    %190 = vdwg.mxu0
    %v191 = vpack.c.bf16 %v188, %v185
    %v192 = vld [vmem:[%s3] sm:$0xf]
    %v193 = vld [vmem:[%s3 + $0x4] sm:$0xf]
    %v194 = vld [vmem:[%s3 + $0x8] sm:$0xf]
    %v195 = vld [vmem:[%s3 + $0xc] sm:$0xf]
    %v196 = vld [vmem:[%s4] sm:$0x1]
    %v198 = vlaneseq
    %v199 = vshrl.u32 %v198, 7
    %v200 = vsub.s32 0, %v199
    %v201 = vrot.slane %v196, %v200
    %v207 = vunpack.c.l.b16 %v192
    %v208 = vunpack.c.l.b16 %v193
    %v209 = vunpack.c.l.b16 %v194
    %v210 = vunpack.c.l.b16 %v195
    %v211 = vpack.c.b16 %v208, %v207
    %v212 = vpack.c.b16 %v210, %v209
    %215 = vmatprep.subr.bf16.mxu0 0
    %216 = vmatpush1.bf16.msra.mxu0 %v211
    %217 = vmatprep.subr.bf16.mxu0 0
    %218 = vmatpush1.bf16.msra.mxu0 %v212
    %219 = vmatprep.subr.bf16.mxu0 0
    %220 = vmatpush1.bf16.msra.mxu0 0
    %221 = vmatprep.subr.bf16.mxu0 0
    %222 = vmatpush1.bf16.msra.mxu0 0
    %223 = vmatprep.subr.bf16.mxu0 0
    %224 = vmatpush1.bf16.msra.mxu0 0
    %225 = vmatprep.subr.bf16.mxu0 0
    %226 = vmatpush1.bf16.msra.mxu0 0
    %227 = vmatprep.subr.bf16.mxu0 0
    %228 = vmatpush1.bf16.msra.mxu0 0
    %229 = vmatprep.subr.bf16.mxu0 0
    %230 = vmatpush1.bf16.msra.mxu0 0
    %231 = vmatprep.subr.bf16.mxu0 0
    %232 = vmatpush1.bf16.msra.mxu0 0
    %233 = vmatprep.subr.bf16.mxu0 0
    %234 = vmatpush1.bf16.msra.mxu0 0
    %235 = vmatprep.subr.bf16.mxu0 0
    %236 = vmatpush1.bf16.msra.mxu0 0
    %237 = vmatprep.subr.bf16.mxu0 0
    %238 = vmatpush1.bf16.msra.mxu0 0
    %239 = vmatprep.subr.bf16.mxu0 0
    %240 = vmatpush1.bf16.msra.mxu0 0
    %241 = vmatprep.subr.bf16.mxu0 0
    %242 = vmatpush1.bf16.msra.mxu0 0
    %243 = vmatprep.subr.bf16.mxu0 0
    %244 = vmatpush1.bf16.msra.mxu0 0
    %245 = vmatprep.subr.bf16.mxu0 0
    %246 = vmatpush1.bf16.msra.mxu0 0
    %247 = vmatprep.mubr.bf16.mxu0 0
    %248 = vmatmul.mubr.bf16.gmra.mrb[0].mxu0 %v148
    %v249 = vpop.f32.mrb[0].mxu0
    %v250 = vadd.f32 %v201, %v249
    %v251 = vpop.f32.mrb[0].mxu0
    %v252 = vpop.f32.mrb[0].mxu0
    %v253 = vadd.f32 %v201, %v252
    %v254 = vpop.f32.mrb[0].mxu0
    %255 = vdwg.mxu0
    %v256 = vpack.c.bf16 %v253, %v250
    %v257 = vld [vmem:[#allocation2] sm:$0xf]
    %v258 = vld [vmem:[#allocation2 + $0x4] sm:$0xf]
    %v259 = vld [vmem:[#allocation2 + $0x8] sm:$0xf]
    %v260 = vld [vmem:[#allocation2 + $0xc] sm:$0xf]
    %v261 = vld [vmem:[#allocation5] sm:$0x1]
    %v263 = vlaneseq
    %v264 = vshrl.u32 %v263, 7
    %v265 = vsub.s32 0, %v264
    %v266 = vrot.slane %v261, %v265
    %v272 = vunpack.c.l.b16 %v257
    %v273 = vunpack.c.l.b16 %v258
    %v274 = vunpack.c.l.b16 %v259
    %v275 = vunpack.c.l.b16 %v260
    %v276 = vpack.c.b16 %v273, %v272
    %v277 = vpack.c.b16 %v275, %v274
    %280 = vmatprep.subr.bf16.mxu0 0
    %281 = vmatpush1.bf16.msra.mxu0 %v276
    %282 = vmatprep.subr.bf16.mxu0 0
    %283 = vmatpush1.bf16.msra.mxu0 %v277
    %284 = vmatprep.subr.bf16.mxu0 0
    %285 = vmatpush1.bf16.msra.mxu0 0
    %286 = vmatprep.subr.bf16.mxu0 0
    %287 = vmatpush1.bf16.msra.mxu0 0
    %288 = vmatprep.subr.bf16.mxu0 0
    %289 = vmatpush1.bf16.msra.mxu0 0
    %290 = vmatprep.subr.bf16.mxu0 0
    %291 = vmatpush1.bf16.msra.mxu0 0
    %292 = vmatprep.subr.bf16.mxu0 0
    %293 = vmatpush1.bf16.msra.mxu0 0
    %294 = vmatprep.subr.bf16.mxu0 0
    %295 = vmatpush1.bf16.msra.mxu0 0
    %296 = vmatprep.subr.bf16.mxu0 0
    %297 = vmatpush1.bf16.msra.mxu0 0
    %298 = vmatprep.subr.bf16.mxu0 0
    %299 = vmatpush1.bf16.msra.mxu0 0
    %300 = vmatprep.subr.bf16.mxu0 0
    %301 = vmatpush1.bf16.msra.mxu0 0
    %302 = vmatprep.subr.bf16.mxu0 0
    %303 = vmatpush1.bf16.msra.mxu0 0
    %304 = vmatprep.subr.bf16.mxu0 0
    %305 = vmatpush1.bf16.msra.mxu0 0
    %306 = vmatprep.subr.bf16.mxu0 0
    %307 = vmatpush1.bf16.msra.mxu0 0
    %308 = vmatprep.subr.bf16.mxu0 0
    %309 = vmatpush1.bf16.msra.mxu0 0
    %310 = vmatprep.subr.bf16.mxu0 0
    %311 = vmatpush1.bf16.msra.mxu0 0
    %312 = vmatprep.mubr.bf16.mxu0 0
    %313 = vmatmul.mubr.bf16.gmra.mrb[0].mxu0 %v148
    %v314 = vpop.f32.mrb[0].mxu0
    %v315 = vadd.f32 %v266, %v314
    %v316 = vpop.f32.mrb[0].mxu0
    %v317 = vpop.f32.mrb[0].mxu0
    %v318 = vadd.f32 %v266, %v317
    %v319 = vpop.f32.mrb[0].mxu0
    %320 = vdwg.mxu0
    %v321 = vpack.c.bf16 %v318, %v315
    %v322 = vld [vmem:[#allocation7] sm:$0xf]
    %v323 = vld [vmem:[#allocation7 + $0x4] sm:$0xf]
    %v324 = vld [vmem:[#allocation7 + $0x8] sm:$0xf]
    %v325 = vld [vmem:[#allocation7 + $0xc] sm:$0xf]
    %vm326 = vcmask 64512
    %v328 = vsel %vm326, %v191, 0
    %v331 = vsel %vm326, %v256, 0
    %333 = vmatprep.subr.bf16.mxu0 0
    %334 = vmatpush1.bf16.xpose.msra.mxu0 %v331
    %335 = vmatprep.subr.bf16.mxu0 0
    %336 = vmatpush1.bf16.xpose.msra.mxu0 0
    %337 = vmatprep.subr.bf16.mxu0 0
    %338 = vmatpush1.bf16.xpose.msra.mxu0 0
    %339 = vmatprep.subr.bf16.mxu0 0
    %340 = vmatpush1.bf16.xpose.msra.mxu0 0
    %341 = vmatprep.subr.bf16.mxu0 0
    %342 = vmatpush1.bf16.xpose.msra.mxu0 0
    %343 = vmatprep.subr.bf16.mxu0 0
    %344 = vmatpush1.bf16.xpose.msra.mxu0 0
    %345 = vmatprep.subr.bf16.mxu0 0
    %346 = vmatpush1.bf16.xpose.msra.mxu0 0
    %347 = vmatprep.subr.bf16.mxu0 0
    %348 = vmatpush1.bf16.xpose.msra.mxu0 0
    %349 = vmatprep.subr.bf16.mxu0 0
    %350 = vmatpush1.bf16.xpose.msra.mxu0 0
    %351 = vmatprep.subr.bf16.mxu0 0
    %352 = vmatpush1.bf16.xpose.msra.mxu0 0
    %353 = vmatprep.subr.bf16.mxu0 0
    %354 = vmatpush1.bf16.xpose.msra.mxu0 0
    %355 = vmatprep.subr.bf16.mxu0 0
    %356 = vmatpush1.bf16.xpose.msra.mxu0 0
    %357 = vmatprep.subr.bf16.mxu0 0
    %358 = vmatpush1.bf16.xpose.msra.mxu0 0
    %359 = vmatprep.subr.bf16.mxu0 0
    %360 = vmatpush1.bf16.xpose.msra.mxu0 0
    %361 = vmatprep.subr.bf16.mxu0 0
    %362 = vmatpush1.bf16.xpose.msra.mxu0 0
    %363 = vmatprep.subr.bf16.mxu0 0
    %364 = vmatpush1.bf16.xpose.msra.mxu0 0
    %365 = vmatprep.mubr.bf16.mxu0 0
    %366 = vmatmul.mubr.bf16.gmra.mrb[0].mxu0 %v328
    %v367 = vpop.f32.mrb[0].mxu0
    %v368 = vadd.f32 0.0, %v367
    %v369 = vpop.f32.mrb[0].mxu0
    %v370 = vpop.f32.mrb[0].mxu0
    %v371 = vpop.f32.mrb[0].mxu0
    %372 = vdwg.mxu0
    %v373 = vsel %vm326, %v368, -inf
    %374 = vmax.xlane.f32.xlu0 %v373
    %v375 = vpop.xlane.xlu0 %374
    %v376 = vsub.f32 %v368, %v375
    %v377 = vmul.f32 %v376, 1.442695
    %v378 = vpow.pop %v377
    %v379 = vsel %vm326, %v378, 0.0
    %380 = vadd.xlane.f32.xlu0 %v379
    %v381 = vpop.xlane.xlu0 %380
    %v382 = vrcp.pop %v381
    %v383 = vmul.f32 %v378, %v382
    %v384 = vpack.c.bf16 %v383, %v383
    %v386 = vsel %vm326, %v384, 0
    %vm388 = vcmask 1043456
    %v390 = vsel %vm388, %v321, 0
    %392 = vmatprep.subr.bf16.mxu0 0
    %393 = vmatpush1.bf16.msra.mxu0 %v390
    %394 = vmatprep.subr.bf16.mxu0 0
    %395 = vmatpush1.bf16.msra.mxu0 0
    %396 = vmatprep.subr.bf16.mxu0 0
    %397 = vmatpush1.bf16.msra.mxu0 0
    %398 = vmatprep.subr.bf16.mxu0 0
    %399 = vmatpush1.bf16.msra.mxu0 0
    %400 = vmatprep.subr.bf16.mxu0 0
    %401 = vmatpush1.bf16.msra.mxu0 0
    %402 = vmatprep.subr.bf16.mxu0 0
    %403 = vmatpush1.bf16.msra.mxu0 0
    %404 = vmatprep.subr.bf16.mxu0 0
    %405 = vmatpush1.bf16.msra.mxu0 0
    %406 = vmatprep.subr.bf16.mxu0 0
    %407 = vmatpush1.bf16.msra.mxu0 0
    %408 = vmatprep.subr.bf16.mxu0 0
    %409 = vmatpush1.bf16.msra.mxu0 0
    %410 = vmatprep.subr.bf16.mxu0 0
    %411 = vmatpush1.bf16.msra.mxu0 0
    %412 = vmatprep.subr.bf16.mxu0 0
    %413 = vmatpush1.bf16.msra.mxu0 0
    %414 = vmatprep.subr.bf16.mxu0 0
    %415 = vmatpush1.bf16.msra.mxu0 0
    %416 = vmatprep.subr.bf16.mxu0 0
    %417 = vmatpush1.bf16.msra.mxu0 0
    %418 = vmatprep.subr.bf16.mxu0 0
    %419 = vmatpush1.bf16.msra.mxu0 0
    %420 = vmatprep.subr.bf16.mxu0 0
    %421 = vmatpush1.bf16.msra.mxu0 0
    %422 = vmatprep.subr.bf16.mxu0 0
    %423 = vmatpush1.bf16.msra.mxu0 0
    %424 = vmatprep.mubr.bf16.mxu0 0
    %425 = vmatmul.mubr.bf16.gmra.mrb[0].mxu0 %v386
    %v426 = vpop.f32.mrb[0].mxu0
    %v427 = vadd.f32 0.0, %v426
    %v428 = vpop.f32.mrb[0].mxu0
    %v429 = vpop.f32.mrb[0].mxu0
    %v430 = vpop.f32.mrb[0].mxu0
    %431 = vdwg.mxu0
    %v432 = vpack.c.bf16 %v427, %v427
    %434 = vrot.lane.b32.xlu0 %v191, 120
    %v435 = vpop.permute.xlu0 %434
    %437 = vrot.lane.b32.xlu0 %v256, 120
    %v438 = vpop.permute.xlu0 %437
    %v440 = vsel %vm326, %v435, 0
    %v443 = vsel %vm326, %v438, 0
    %445 = vmatprep.subr.bf16.mxu0 0
    %446 = vmatpush1.bf16.xpose.msra.mxu0 %v443
    %447 = vmatprep.subr.bf16.mxu0 0
    %448 = vmatpush1.bf16.xpose.msra.mxu0 0
    %449 = vmatprep.subr.bf16.mxu0 0
    %450 = vmatpush1.bf16.xpose.msra.mxu0 0
    %451 = vmatprep.subr.bf16.mxu0 0
    %452 = vmatpush1.bf16.xpose.msra.mxu0 0
    %453 = vmatprep.subr.bf16.mxu0 0
    %454 = vmatpush1.bf16.xpose.msra.mxu0 0
    %455 = vmatprep.subr.bf16.mxu0 0
    %456 = vmatpush1.bf16.xpose.msra.mxu0 0
    %457 = vmatprep.subr.bf16.mxu0 0
    %458 = vmatpush1.bf16.xpose.msra.mxu0 0
    %459 = vmatprep.subr.bf16.mxu0 0
    %460 = vmatpush1.bf16.xpose.msra.mxu0 0
    %461 = vmatprep.subr.bf16.mxu0 0
    %462 = vmatpush1.bf16.xpose.msra.mxu0 0
    %463 = vmatprep.subr.bf16.mxu0 0
    %464 = vmatpush1.bf16.xpose.msra.mxu0 0
    %465 = vmatprep.subr.bf16.mxu0 0
    %466 = vmatpush1.bf16.xpose.msra.mxu0 0
    %467 = vmatprep.subr.bf16.mxu0 0
    %468 = vmatpush1.bf16.xpose.msra.mxu0 0
    %469 = vmatprep.subr.bf16.mxu0 0
    %470 = vmatpush1.bf16.xpose.msra.mxu0 0
    %471 = vmatprep.subr.bf16.mxu0 0
    %472 = vmatpush1.bf16.xpose.msra.mxu0 0
    %473 = vmatprep.subr.bf16.mxu0 0
    %474 = vmatpush1.bf16.xpose.msra.mxu0 0
    %475 = vmatprep.subr.bf16.mxu0 0
    %476 = vmatpush1.bf16.xpose.msra.mxu0 0
    %477 = vmatprep.mubr.bf16.mxu0 0
    %478 = vmatmul.mubr.bf16.gmra.mrb[0].mxu0 %v440
    %v479 = vpop.f32.mrb[0].mxu0
    %v480 = vadd.f32 0.0, %v479
    %v481 = vpop.f32.mrb[0].mxu0
    %v482 = vpop.f32.mrb[0].mxu0
    %v483 = vpop.f32.mrb[0].mxu0
    %484 = vdwg.mxu0
    %v485 = vsel %vm326, %v480, -inf
    %486 = vmax.xlane.f32.xlu0 %v485
    %v487 = vpop.xlane.xlu0 %486
    %v488 = vsub.f32 %v480, %v487
    %v489 = vmul.f32 %v488, 1.442695
    %v490 = vpow.pop %v489
    %v491 = vsel %vm326, %v490, 0.0
    %492 = vadd.xlane.f32.xlu0 %v491
    %v493 = vpop.xlane.xlu0 %492
    %v494 = vrcp.pop %v493
    %v495 = vmul.f32 %v490, %v494
    %v496 = vpack.c.bf16 %v495, %v495
    %498 = vrot.lane.b32.xlu0 %v321, 120
    %v499 = vpop.permute.xlu0 %498
    %v501 = vsel %vm326, %v496, 0
    %v504 = vsel %vm388, %v499, 0
    %506 = vmatprep.subr.bf16.mxu0 0
    %507 = vmatpush1.bf16.msra.mxu0 %v504
    %508 = vmatprep.subr.bf16.mxu0 0
    %509 = vmatpush1.bf16.msra.mxu0 0
    %510 = vmatprep.subr.bf16.mxu0 0
    %511 = vmatpush1.bf16.msra.mxu0 0
    %512 = vmatprep.subr.bf16.mxu0 0
    %513 = vmatpush1.bf16.msra.mxu0 0
    %514 = vmatprep.subr.bf16.mxu0 0
    %515 = vmatpush1.bf16.msra.mxu0 0
    %516 = vmatprep.subr.bf16.mxu0 0
    %517 = vmatpush1.bf16.msra.mxu0 0
    %518 = vmatprep.subr.bf16.mxu0 0
    %519 = vmatpush1.bf16.msra.mxu0 0
    %520 = vmatprep.subr.bf16.mxu0 0
    %521 = vmatpush1.bf16.msra.mxu0 0
    %522 = vmatprep.subr.bf16.mxu0 0
    %523 = vmatpush1.bf16.msra.mxu0 0
    %524 = vmatprep.subr.bf16.mxu0 0
    %525 = vmatpush1.bf16.msra.mxu0 0
    %526 = vmatprep.subr.bf16.mxu0 0
    %527 = vmatpush1.bf16.msra.mxu0 0
    %528 = vmatprep.subr.bf16.mxu0 0
    %529 = vmatpush1.bf16.msra.mxu0 0
    %530 = vmatprep.subr.bf16.mxu0 0
    %531 = vmatpush1.bf16.msra.mxu0 0
    %532 = vmatprep.subr.bf16.mxu0 0
    %533 = vmatpush1.bf16.msra.mxu0 0
    %534 = vmatprep.subr.bf16.mxu0 0
    %535 = vmatpush1.bf16.msra.mxu0 0
    %536 = vmatprep.subr.bf16.mxu0 0
    %537 = vmatpush1.bf16.msra.mxu0 0
    %538 = vmatprep.mubr.bf16.mxu0 0
    %539 = vmatmul.mubr.bf16.gmra.mrb[0].mxu0 %v501
    %v540 = vpop.f32.mrb[0].mxu0
    %v541 = vadd.f32 0.0, %v540
    %v542 = vpop.f32.mrb[0].mxu0
    %v543 = vpop.f32.mrb[0].mxu0
    %v544 = vpop.f32.mrb[0].mxu0
    %545 = vdwg.mxu0
    %v546 = vpack.c.bf16 %v541, %v541
    %v548 = vsel %vm326, %v546, 0
    %v551 = vsel %vm388, %v323, 0
    %553 = vmatprep.subr.bf16.mxu0 0
    %554 = vmatpush1.bf16.msra.mxu0 %v551
    %555 = vmatprep.subr.bf16.mxu0 0
    %556 = vmatpush1.bf16.msra.mxu0 0
    %557 = vmatprep.subr.bf16.mxu0 0
    %558 = vmatpush1.bf16.msra.mxu0 0
    %559 = vmatprep.subr.bf16.mxu0 0
    %560 = vmatpush1.bf16.msra.mxu0 0
    %561 = vmatprep.subr.bf16.mxu0 0
    %562 = vmatpush1.bf16.msra.mxu0 0
    %563 = vmatprep.subr.bf16.mxu0 0
    %564 = vmatpush1.bf16.msra.mxu0 0
    %565 = vmatprep.subr.bf16.mxu0 0
    %566 = vmatpush1.bf16.msra.mxu0 0
    %567 = vmatprep.subr.bf16.mxu0 0
    %568 = vmatpush1.bf16.msra.mxu0 0
    %569 = vmatprep.subr.bf16.mxu0 0
    %570 = vmatpush1.bf16.msra.mxu0 0
    %571 = vmatprep.subr.bf16.mxu0 0
    %572 = vmatpush1.bf16.msra.mxu0 0
    %573 = vmatprep.subr.bf16.mxu0 0
    %574 = vmatpush1.bf16.msra.mxu0 0
    %575 = vmatprep.subr.bf16.mxu0 0
    %576 = vmatpush1.bf16.msra.mxu0 0
    %577 = vmatprep.subr.bf16.mxu0 0
    %578 = vmatpush1.bf16.msra.mxu0 0
    %579 = vmatprep.subr.bf16.mxu0 0
    %580 = vmatpush1.bf16.msra.mxu0 0
    %581 = vmatprep.subr.bf16.mxu0 0
    %582 = vmatpush1.bf16.msra.mxu0 0
    %583 = vmatprep.subr.bf16.mxu0 0
    %584 = vmatpush1.bf16.msra.mxu0 0
    %585 = vmatprep.mubr.bf16.mxu0 0
    %586 = vmatmul.mubr.bf16.gmra.mrb[0].mxu0 %v548
    %v587 = vpop.f32.mrb[0].mxu0
    %v588 = vadd.f32 0.0, %v587
    %v589 = vpop.f32.mrb[0].mxu0
    %v590 = vpop.f32.mrb[0].mxu0
    %v591 = vpop.f32.mrb[0].mxu0
    %592 = vdwg.mxu0
    %v594 = vsel %vm326, %v432, 0
    %v597 = vsel %vm388, %v322, 0
    %599 = vmatprep.subr.bf16.mxu0 0
    %600 = vmatpush1.bf16.msra.mxu0 %v597
    %601 = vmatprep.subr.bf16.mxu0 0
    %602 = vmatpush1.bf16.msra.mxu0 0
    %603 = vmatprep.subr.bf16.mxu0 0
    %604 = vmatpush1.bf16.msra.mxu0 0
    %605 = vmatprep.subr.bf16.mxu0 0
    %606 = vmatpush1.bf16.msra.mxu0 0
    %607 = vmatprep.subr.bf16.mxu0 0
    %608 = vmatpush1.bf16.msra.mxu0 0
    %609 = vmatprep.subr.bf16.mxu0 0
    %610 = vmatpush1.bf16.msra.mxu0 0
    %611 = vmatprep.subr.bf16.mxu0 0
    %612 = vmatpush1.bf16.msra.mxu0 0
    %613 = vmatprep.subr.bf16.mxu0 0
    %614 = vmatpush1.bf16.msra.mxu0 0
    %615 = vmatprep.subr.bf16.mxu0 0
    %616 = vmatpush1.bf16.msra.mxu0 0
    %617 = vmatprep.subr.bf16.mxu0 0
    %618 = vmatpush1.bf16.msra.mxu0 0
    %619 = vmatprep.subr.bf16.mxu0 0
    %620 = vmatpush1.bf16.msra.mxu0 0
    %621 = vmatprep.subr.bf16.mxu0 0
    %622 = vmatpush1.bf16.msra.mxu0 0
    %623 = vmatprep.subr.bf16.mxu0 0
    %624 = vmatpush1.bf16.msra.mxu0 0
    %625 = vmatprep.subr.bf16.mxu0 0
    %626 = vmatpush1.bf16.msra.mxu0 0
    %627 = vmatprep.subr.bf16.mxu0 0
    %628 = vmatpush1.bf16.msra.mxu0 0
    %629 = vmatprep.subr.bf16.mxu0 0
    %630 = vmatpush1.bf16.msra.mxu0 0
    %631 = vmatprep.mubr.bf16.mxu0 0
    %632 = vmatmul.mubr.bf16.gmra.mrb[0].mxu0 %v594
    %v633 = vpop.f32.mrb[0].mxu0
    %v634 = vadd.f32 %v588, %v633
    %v635 = vpop.f32.mrb[0].mxu0
    %v636 = vpop.f32.mrb[0].mxu0
    %v637 = vpop.f32.mrb[0].mxu0
    %638 = vdwg.mxu0
    %639 = vrot.lane.b32.xlu0 %v191, 112
    %v640 = vpop.permute.xlu0 %639
    %641 = vrot.lane.b32.xlu0 %v256, 112
    %v642 = vpop.permute.xlu0 %641
    %v644 = vsel %vm326, %v640, 0
    %v647 = vsel %vm326, %v642, 0
    %649 = vmatprep.subr.bf16.mxu0 0
    %650 = vmatpush1.bf16.xpose.msra.mxu0 %v647
    %651 = vmatprep.subr.bf16.mxu0 0
    %652 = vmatpush1.bf16.xpose.msra.mxu0 0
    %653 = vmatprep.subr.bf16.mxu0 0
    %654 = vmatpush1.bf16.xpose.msra.mxu0 0
    %655 = vmatprep.subr.bf16.mxu0 0
    %656 = vmatpush1.bf16.xpose.msra.mxu0 0
    %657 = vmatprep.subr.bf16.mxu0 0
    %658 = vmatpush1.bf16.xpose.msra.mxu0 0
    %659 = vmatprep.subr.bf16.mxu0 0
    %660 = vmatpush1.bf16.xpose.msra.mxu0 0
    %661 = vmatprep.subr.bf16.mxu0 0
    %662 = vmatpush1.bf16.xpose.msra.mxu0 0
    %663 = vmatprep.subr.bf16.mxu0 0
    %664 = vmatpush1.bf16.xpose.msra.mxu0 0
    %665 = vmatprep.subr.bf16.mxu0 0
    %666 = vmatpush1.bf16.xpose.msra.mxu0 0
    %667 = vmatprep.subr.bf16.mxu0 0
    %668 = vmatpush1.bf16.xpose.msra.mxu0 0
    %669 = vmatprep.subr.bf16.mxu0 0
    %670 = vmatpush1.bf16.xpose.msra.mxu0 0
    %671 = vmatprep.subr.bf16.mxu0 0
    %672 = vmatpush1.bf16.xpose.msra.mxu0 0
    %673 = vmatprep.subr.bf16.mxu0 0
    %674 = vmatpush1.bf16.xpose.msra.mxu0 0
    %675 = vmatprep.subr.bf16.mxu0 0
    %676 = vmatpush1.bf16.xpose.msra.mxu0 0
    %677 = vmatprep.subr.bf16.mxu0 0
    %678 = vmatpush1.bf16.xpose.msra.mxu0 0
    %679 = vmatprep.subr.bf16.mxu0 0
    %680 = vmatpush1.bf16.xpose.msra.mxu0 0
    %681 = vmatprep.mubr.bf16.mxu0 0
    %682 = vmatmul.mubr.bf16.gmra.mrb[0].mxu0 %v644
    %v683 = vpop.f32.mrb[0].mxu0
    %v684 = vadd.f32 0.0, %v683
    %v685 = vpop.f32.mrb[0].mxu0
    %v686 = vpop.f32.mrb[0].mxu0
    %v687 = vpop.f32.mrb[0].mxu0
    %688 = vdwg.mxu0
    %v689 = vsel %vm326, %v684, -inf
    %690 = vmax.xlane.f32.xlu0 %v689
    %v691 = vpop.xlane.xlu0 %690
    %v692 = vsub.f32 %v684, %v691
    %v693 = vmul.f32 %v692, 1.442695
    %v694 = vpow.pop %v693
    %v695 = vsel %vm326, %v694, 0.0
    %696 = vadd.xlane.f32.xlu0 %v695
    %v697 = vpop.xlane.xlu0 %696
    %v698 = vrcp.pop %v697
    %v699 = vmul.f32 %v694, %v698
    %v700 = vpack.c.bf16 %v699, %v699
    %701 = vrot.lane.b32.xlu0 %v321, 112
    %v702 = vpop.permute.xlu0 %701
    %v704 = vsel %vm326, %v700, 0
    %v707 = vsel %vm388, %v702, 0
    %709 = vmatprep.subr.bf16.mxu0 0
    %710 = vmatpush1.bf16.msra.mxu0 %v707
    %711 = vmatprep.subr.bf16.mxu0 0
    %712 = vmatpush1.bf16.msra.mxu0 0
    %713 = vmatprep.subr.bf16.mxu0 0
    %714 = vmatpush1.bf16.msra.mxu0 0
    %715 = vmatprep.subr.bf16.mxu0 0
    %716 = vmatpush1.bf16.msra.mxu0 0
    %717 = vmatprep.subr.bf16.mxu0 0
    %718 = vmatpush1.bf16.msra.mxu0 0
    %719 = vmatprep.subr.bf16.mxu0 0
    %720 = vmatpush1.bf16.msra.mxu0 0
    %721 = vmatprep.subr.bf16.mxu0 0
    %722 = vmatpush1.bf16.msra.mxu0 0
    %723 = vmatprep.subr.bf16.mxu0 0
    %724 = vmatpush1.bf16.msra.mxu0 0
    %725 = vmatprep.subr.bf16.mxu0 0
    %726 = vmatpush1.bf16.msra.mxu0 0
    %727 = vmatprep.subr.bf16.mxu0 0
    %728 = vmatpush1.bf16.msra.mxu0 0
    %729 = vmatprep.subr.bf16.mxu0 0
    %730 = vmatpush1.bf16.msra.mxu0 0
    %731 = vmatprep.subr.bf16.mxu0 0
    %732 = vmatpush1.bf16.msra.mxu0 0
    %733 = vmatprep.subr.bf16.mxu0 0
    %734 = vmatpush1.bf16.msra.mxu0 0
    %735 = vmatprep.subr.bf16.mxu0 0
    %736 = vmatpush1.bf16.msra.mxu0 0
    %737 = vmatprep.subr.bf16.mxu0 0
    %738 = vmatpush1.bf16.msra.mxu0 0
    %739 = vmatprep.subr.bf16.mxu0 0
    %740 = vmatpush1.bf16.msra.mxu0 0
    %741 = vmatprep.mubr.bf16.mxu0 0
    %742 = vmatmul.mubr.bf16.gmra.mrb[0].mxu0 %v704
    %v743 = vpop.f32.mrb[0].mxu0
    %v744 = vadd.f32 0.0, %v743
    %v745 = vpop.f32.mrb[0].mxu0
    %v746 = vpop.f32.mrb[0].mxu0
    %v747 = vpop.f32.mrb[0].mxu0
    %748 = vdwg.mxu0
    %v749 = vpack.c.bf16 %v744, %v744
    %v751 = vsel %vm326, %v749, 0
    %v754 = vsel %vm388, %v324, 0
    %756 = vmatprep.subr.bf16.mxu0 0
    %757 = vmatpush1.bf16.msra.mxu0 %v754
    %758 = vmatprep.subr.bf16.mxu0 0
    %759 = vmatpush1.bf16.msra.mxu0 0
    %760 = vmatprep.subr.bf16.mxu0 0
    %761 = vmatpush1.bf16.msra.mxu0 0
    %762 = vmatprep.subr.bf16.mxu0 0
    %763 = vmatpush1.bf16.msra.mxu0 0
    %764 = vmatprep.subr.bf16.mxu0 0
    %765 = vmatpush1.bf16.msra.mxu0 0
    %766 = vmatprep.subr.bf16.mxu0 0
    %767 = vmatpush1.bf16.msra.mxu0 0
    %768 = vmatprep.subr.bf16.mxu0 0
    %769 = vmatpush1.bf16.msra.mxu0 0
    %770 = vmatprep.subr.bf16.mxu0 0
    %771 = vmatpush1.bf16.msra.mxu0 0
    %772 = vmatprep.subr.bf16.mxu0 0
    %773 = vmatpush1.bf16.msra.mxu0 0
    %774 = vmatprep.subr.bf16.mxu0 0
    %775 = vmatpush1.bf16.msra.mxu0 0
    %776 = vmatprep.subr.bf16.mxu0 0
    %777 = vmatpush1.bf16.msra.mxu0 0
    %778 = vmatprep.subr.bf16.mxu0 0
    %779 = vmatpush1.bf16.msra.mxu0 0
    %780 = vmatprep.subr.bf16.mxu0 0
    %781 = vmatpush1.bf16.msra.mxu0 0
    %782 = vmatprep.subr.bf16.mxu0 0
    %783 = vmatpush1.bf16.msra.mxu0 0
    %784 = vmatprep.subr.bf16.mxu0 0
    %785 = vmatpush1.bf16.msra.mxu0 0
    %786 = vmatprep.subr.bf16.mxu0 0
    %787 = vmatpush1.bf16.msra.mxu0 0
    %788 = vmatprep.mubr.bf16.mxu0 0
    %789 = vmatmul.mubr.bf16.gmra.mrb[0].mxu0 %v751
    %v790 = vpop.f32.mrb[0].mxu0
    %v791 = vadd.f32 0.0, %v790
    %v792 = vpop.f32.mrb[0].mxu0
    %v793 = vpop.f32.mrb[0].mxu0
    %v794 = vpop.f32.mrb[0].mxu0
    %795 = vdwg.mxu0
    %v796 = vadd.f32 %v634, %v791
    %797 = vrot.lane.b32.xlu0 %v191, 104
    %v798 = vpop.permute.xlu0 %797
    %799 = vrot.lane.b32.xlu0 %v256, 104
    %v800 = vpop.permute.xlu0 %799
    %v802 = vsel %vm326, %v798, 0
    %v805 = vsel %vm326, %v800, 0
    %807 = vmatprep.subr.bf16.mxu0 0
    %808 = vmatpush1.bf16.xpose.msra.mxu0 %v805
    %809 = vmatprep.subr.bf16.mxu0 0
    %810 = vmatpush1.bf16.xpose.msra.mxu0 0
    %811 = vmatprep.subr.bf16.mxu0 0
    %812 = vmatpush1.bf16.xpose.msra.mxu0 0
    %813 = vmatprep.subr.bf16.mxu0 0
    %814 = vmatpush1.bf16.xpose.msra.mxu0 0
    %815 = vmatprep.subr.bf16.mxu0 0
    %816 = vmatpush1.bf16.xpose.msra.mxu0 0
    %817 = vmatprep.subr.bf16.mxu0 0
    %818 = vmatpush1.bf16.xpose.msra.mxu0 0
    %819 = vmatprep.subr.bf16.mxu0 0
    %820 = vmatpush1.bf16.xpose.msra.mxu0 0
    %821 = vmatprep.subr.bf16.mxu0 0
    %822 = vmatpush1.bf16.xpose.msra.mxu0 0
    %823 = vmatprep.subr.bf16.mxu0 0
    %824 = vmatpush1.bf16.xpose.msra.mxu0 0
    %825 = vmatprep.subr.bf16.mxu0 0
    %826 = vmatpush1.bf16.xpose.msra.mxu0 0
    %827 = vmatprep.subr.bf16.mxu0 0
    %828 = vmatpush1.bf16.xpose.msra.mxu0 0
    %829 = vmatprep.subr.bf16.mxu0 0
    %830 = vmatpush1.bf16.xpose.msra.mxu0 0
    %831 = vmatprep.subr.bf16.mxu0 0
    %832 = vmatpush1.bf16.xpose.msra.mxu0 0
    %833 = vmatprep.subr.bf16.mxu0 0
    %834 = vmatpush1.bf16.xpose.msra.mxu0 0
    %835 = vmatprep.subr.bf16.mxu0 0
    %836 = vmatpush1.bf16.xpose.msra.mxu0 0
    %837 = vmatprep.subr.bf16.mxu0 0
    %838 = vmatpush1.bf16.xpose.msra.mxu0 0
    %839 = vmatprep.mubr.bf16.mxu0 0
    %840 = vmatmul.mubr.bf16.gmra.mrb[0].mxu0 %v802
    %v841 = vpop.f32.mrb[0].mxu0
    %v842 = vadd.f32 0.0, %v841
    %v843 = vpop.f32.mrb[0].mxu0
    %v844 = vpop.f32.mrb[0].mxu0
    %v845 = vpop.f32.mrb[0].mxu0
    %846 = vdwg.mxu0
    %v847 = vsel %vm326, %v842, -inf
    %848 = vmax.xlane.f32.xlu0 %v847
    %v849 = vpop.xlane.xlu0 %848
    %v850 = vsub.f32 %v842, %v849
    %v851 = vmul.f32 %v850, 1.442695
    %v852 = vpow.pop %v851
    %v853 = vsel %vm326, %v852, 0.0
    %854 = vadd.xlane.f32.xlu0 %v853
    %v855 = vpop.xlane.xlu0 %854
    %v856 = vrcp.pop %v855
    %v857 = vmul.f32 %v852, %v856
    %v858 = vpack.c.bf16 %v857, %v857
    %859 = vrot.lane.b32.xlu0 %v321, 104
    %v860 = vpop.permute.xlu0 %859
    %v862 = vsel %vm326, %v858, 0
    %v865 = vsel %vm388, %v860, 0
    %867 = vmatprep.subr.bf16.mxu0 0
    %868 = vmatpush1.bf16.msra.mxu0 %v865
    %869 = vmatprep.subr.bf16.mxu0 0
    %870 = vmatpush1.bf16.msra.mxu0 0
    %871 = vmatprep.subr.bf16.mxu0 0
    %872 = vmatpush1.bf16.msra.mxu0 0
    %873 = vmatprep.subr.bf16.mxu0 0
    %874 = vmatpush1.bf16.msra.mxu0 0
    %875 = vmatprep.subr.bf16.mxu0 0
    %876 = vmatpush1.bf16.msra.mxu0 0
    %877 = vmatprep.subr.bf16.mxu0 0
    %878 = vmatpush1.bf16.msra.mxu0 0
    %879 = vmatprep.subr.bf16.mxu0 0
    %880 = vmatpush1.bf16.msra.mxu0 0
    %881 = vmatprep.subr.bf16.mxu0 0
    %882 = vmatpush1.bf16.msra.mxu0 0
    %883 = vmatprep.subr.bf16.mxu0 0
    %884 = vmatpush1.bf16.msra.mxu0 0
    %885 = vmatprep.subr.bf16.mxu0 0
    %886 = vmatpush1.bf16.msra.mxu0 0
    %887 = vmatprep.subr.bf16.mxu0 0
    %888 = vmatpush1.bf16.msra.mxu0 0
    %889 = vmatprep.subr.bf16.mxu0 0
    %890 = vmatpush1.bf16.msra.mxu0 0
    %891 = vmatprep.subr.bf16.mxu0 0
    %892 = vmatpush1.bf16.msra.mxu0 0
    %893 = vmatprep.subr.bf16.mxu0 0
    %894 = vmatpush1.bf16.msra.mxu0 0
    %895 = vmatprep.subr.bf16.mxu0 0
    %896 = vmatpush1.bf16.msra.mxu0 0
    %897 = vmatprep.subr.bf16.mxu0 0
    %898 = vmatpush1.bf16.msra.mxu0 0
    %899 = vmatprep.mubr.bf16.mxu0 0
    %900 = vmatmul.mubr.bf16.gmra.mrb[0].mxu0 %v862
    %v901 = vpop.f32.mrb[0].mxu0
    %v902 = vadd.f32 0.0, %v901
    %v903 = vpop.f32.mrb[0].mxu0
    %v904 = vpop.f32.mrb[0].mxu0
    %v905 = vpop.f32.mrb[0].mxu0
    %906 = vdwg.mxu0
    %v907 = vpack.c.bf16 %v902, %v902
    %v909 = vsel %vm326, %v907, 0
    %v912 = vsel %vm388, %v325, 0
    %914 = vmatprep.subr.bf16.mxu0 0
    %915 = vmatpush1.bf16.msra.mxu0 %v912
    %916 = vmatprep.subr.bf16.mxu0 0
    %917 = vmatpush1.bf16.msra.mxu0 0
    %918 = vmatprep.subr.bf16.mxu0 0
    %919 = vmatpush1.bf16.msra.mxu0 0
    %920 = vmatprep.subr.bf16.mxu0 0
    %921 = vmatpush1.bf16.msra.mxu0 0
    %922 = vmatprep.subr.bf16.mxu0 0
    %923 = vmatpush1.bf16.msra.mxu0 0
    %924 = vmatprep.subr.bf16.mxu0 0
    %925 = vmatpush1.bf16.msra.mxu0 0
    %926 = vmatprep.subr.bf16.mxu0 0
    %927 = vmatpush1.bf16.msra.mxu0 0
    %928 = vmatprep.subr.bf16.mxu0 0
    %929 = vmatpush1.bf16.msra.mxu0 0
    %930 = vmatprep.subr.bf16.mxu0 0
    %931 = vmatpush1.bf16.msra.mxu0 0
    %932 = vmatprep.subr.bf16.mxu0 0
    %933 = vmatpush1.bf16.msra.mxu0 0
    %934 = vmatprep.subr.bf16.mxu0 0
    %935 = vmatpush1.bf16.msra.mxu0 0
    %936 = vmatprep.subr.bf16.mxu0 0
    %937 = vmatpush1.bf16.msra.mxu0 0
    %938 = vmatprep.subr.bf16.mxu0 0
    %939 = vmatpush1.bf16.msra.mxu0 0
    %940 = vmatprep.subr.bf16.mxu0 0
    %941 = vmatpush1.bf16.msra.mxu0 0
    %942 = vmatprep.subr.bf16.mxu0 0
    %943 = vmatpush1.bf16.msra.mxu0 0
    %944 = vmatprep.subr.bf16.mxu0 0
    %945 = vmatpush1.bf16.msra.mxu0 0
    %946 = vmatprep.mubr.bf16.mxu0 0
    %947 = vmatmul.mubr.bf16.gmra.mrb[0].mxu0 %v909
    %v948 = vpop.f32.mrb[0].mxu0
    %v949 = vadd.f32 0.0, %v948
    %v950 = vpop.f32.mrb[0].mxu0
    %v951 = vpop.f32.mrb[0].mxu0
    %v952 = vpop.f32.mrb[0].mxu0
    %953 = vdwg.mxu0
    %v954 = vadd.f32 %v796, %v949
    %v955 = vrot.slane %v191, 4
    %v956 = vrot.slane %v256, 4
    %v958 = vsel %vm326, %v955, 0
    %v961 = vsel %vm326, %v956, 0
    %963 = vmatprep.subr.bf16.mxu0 0
    %964 = vmatpush1.bf16.xpose.msra.mxu0 %v961
    %965 = vmatprep.subr.bf16.mxu0 0
    %966 = vmatpush1.bf16.xpose.msra.mxu0 0
    %967 = vmatprep.subr.bf16.mxu0 0
    %968 = vmatpush1.bf16.xpose.msra.mxu0 0
    %969 = vmatprep.subr.bf16.mxu0 0
    %970 = vmatpush1.bf16.xpose.msra.mxu0 0
    %971 = vmatprep.subr.bf16.mxu0 0
    %972 = vmatpush1.bf16.xpose.msra.mxu0 0
    %973 = vmatprep.subr.bf16.mxu0 0
    %974 = vmatpush1.bf16.xpose.msra.mxu0 0
    %975 = vmatprep.subr.bf16.mxu0 0
    %976 = vmatpush1.bf16.xpose.msra.mxu0 0
    %977 = vmatprep.subr.bf16.mxu0 0
    %978 = vmatpush1.bf16.xpose.msra.mxu0 0
    %979 = vmatprep.subr.bf16.mxu0 0
    %980 = vmatpush1.bf16.xpose.msra.mxu0 0
    %981 = vmatprep.subr.bf16.mxu0 0
    %982 = vmatpush1.bf16.xpose.msra.mxu0 0
    %983 = vmatprep.subr.bf16.mxu0 0
    %984 = vmatpush1.bf16.xpose.msra.mxu0 0
    %985 = vmatprep.subr.bf16.mxu0 0
    %986 = vmatpush1.bf16.xpose.msra.mxu0 0
    %987 = vmatprep.subr.bf16.mxu0 0
    %988 = vmatpush1.bf16.xpose.msra.mxu0 0
    %989 = vmatprep.subr.bf16.mxu0 0
    %990 = vmatpush1.bf16.xpose.msra.mxu0 0
    %991 = vmatprep.subr.bf16.mxu0 0
    %992 = vmatpush1.bf16.xpose.msra.mxu0 0
    %993 = vmatprep.subr.bf16.mxu0 0
    %994 = vmatpush1.bf16.xpose.msra.mxu0 0
    %995 = vmatprep.mubr.bf16.mxu0 0
    %996 = vmatmul.mubr.bf16.gmra.mrb[0].mxu0 %v958
    %v997 = vpop.f32.mrb[0].mxu0
    %v998 = vadd.f32 0.0, %v997
    %v999 = vpop.f32.mrb[0].mxu0
    %v1000 = vpop.f32.mrb[0].mxu0
    %v1001 = vpop.f32.mrb[0].mxu0
    %1002 = vdwg.mxu0
    %v1003 = vsel %vm326, %v998, -inf
    %1004 = vmax.xlane.f32.xlu0 %v1003
    %v1005 = vpop.xlane.xlu0 %1004
    %v1006 = vsub.f32 %v998, %v1005
    %v1007 = vmul.f32 %v1006, 1.442695
    %v1008 = vpow.pop %v1007
    %v1009 = vsel %vm326, %v1008, 0.0
    %1010 = vadd.xlane.f32.xlu0 %v1009
    %v1011 = vpop.xlane.xlu0 %1010
    %v1012 = vrcp.pop %v1011
    %v1013 = vmul.f32 %v1008, %v1012
    %v1014 = vpack.c.bf16 %v1013, %v1013
    %v1015 = vrot.slane %v321, 4
    %v1017 = vsel %vm326, %v1014, 0
    %v1020 = vsel %vm388, %v1015, 0
    %1022 = vmatprep.subr.bf16.mxu0 0
    %1023 = vmatpush1.bf16.msra.mxu0 %v1020
    %1024 = vmatprep.subr.bf16.mxu0 0
    %1025 = vmatpush1.bf16.msra.mxu0 0
    %1026 = vmatprep.subr.bf16.mxu0 0
    %1027 = vmatpush1.bf16.msra.mxu0 0
    %1028 = vmatprep.subr.bf16.mxu0 0
    %1029 = vmatpush1.bf16.msra.mxu0 0
    %1030 = vmatprep.subr.bf16.mxu0 0
    %1031 = vmatpush1.bf16.msra.mxu0 0
    %1032 = vmatprep.subr.bf16.mxu0 0
    %1033 = vmatpush1.bf16.msra.mxu0 0
    %1034 = vmatprep.subr.bf16.mxu0 0
    %1035 = vmatpush1.bf16.msra.mxu0 0
    %1036 = vmatprep.subr.bf16.mxu0 0
    %1037 = vmatpush1.bf16.msra.mxu0 0
    %1038 = vmatprep.subr.bf16.mxu0 0
    %1039 = vmatpush1.bf16.msra.mxu0 0
    %1040 = vmatprep.subr.bf16.mxu0 0
    %1041 = vmatpush1.bf16.msra.mxu0 0
    %1042 = vmatprep.subr.bf16.mxu0 0
    %1043 = vmatpush1.bf16.msra.mxu0 0
    %1044 = vmatprep.subr.bf16.mxu0 0
    %1045 = vmatpush1.bf16.msra.mxu0 0
    %1046 = vmatprep.subr.bf16.mxu0 0
    %1047 = vmatpush1.bf16.msra.mxu0 0
    %1048 = vmatprep.subr.bf16.mxu0 0
    %1049 = vmatpush1.bf16.msra.mxu0 0
    %1050 = vmatprep.subr.bf16.mxu0 0
    %1051 = vmatpush1.bf16.msra.mxu0 0
    %1052 = vmatprep.subr.bf16.mxu0 0
    %1053 = vmatpush1.bf16.msra.mxu0 0
    %1054 = vmatprep.mubr.bf16.mxu0 0
    %1055 = vmatmul.mubr.bf16.gmra.mrb[0].mxu0 %v1017
    %v1056 = vpop.f32.mrb[0].mxu0
    %v1057 = vadd.f32 0.0, %v1056
    %v1058 = vpop.f32.mrb[0].mxu0
    %v1059 = vpop.f32.mrb[0].mxu0
    %v1060 = vpop.f32.mrb[0].mxu0
    %1061 = vdwg.mxu0
    %v1062 = vpack.c.bf16 %v1057, %v1057
    %1063 = vrot.lane.b32.xlu0 %v955, 120
    %v1064 = vpop.permute.xlu0 %1063
    %1065 = vrot.lane.b32.xlu0 %v956, 120
    %v1066 = vpop.permute.xlu0 %1065
    %v1068 = vsel %vm326, %v1064, 0
    %v1071 = vsel %vm326, %v1066, 0
    %1073 = vmatprep.subr.bf16.mxu0 0
    %1074 = vmatpush1.bf16.xpose.msra.mxu0 %v1071
    %1075 = vmatprep.subr.bf16.mxu0 0
    %1076 = vmatpush1.bf16.xpose.msra.mxu0 0
    %1077 = vmatprep.subr.bf16.mxu0 0
    %1078 = vmatpush1.bf16.xpose.msra.mxu0 0
    %1079 = vmatprep.subr.bf16.mxu0 0
    %1080 = vmatpush1.bf16.xpose.msra.mxu0 0
    %1081 = vmatprep.subr.bf16.mxu0 0
    %1082 = vmatpush1.bf16.xpose.msra.mxu0 0
    %1083 = vmatprep.subr.bf16.mxu0 0
    %1084 = vmatpush1.bf16.xpose.msra.mxu0 0
    %1085 = vmatprep.subr.bf16.mxu0 0
    %1086 = vmatpush1.bf16.xpose.msra.mxu0 0
    %1087 = vmatprep.subr.bf16.mxu0 0
    %1088 = vmatpush1.bf16.xpose.msra.mxu0 0
    %1089 = vmatprep.subr.bf16.mxu0 0
    %1090 = vmatpush1.bf16.xpose.msra.mxu0 0
    %1091 = vmatprep.subr.bf16.mxu0 0
    %1092 = vmatpush1.bf16.xpose.msra.mxu0 0
    %1093 = vmatprep.subr.bf16.mxu0 0
    %1094 = vmatpush1.bf16.xpose.msra.mxu0 0
    %1095 = vmatprep.subr.bf16.mxu0 0
    %1096 = vmatpush1.bf16.xpose.msra.mxu0 0
    %1097 = vmatprep.subr.bf16.mxu0 0
    %1098 = vmatpush1.bf16.xpose.msra.mxu0 0
    %1099 = vmatprep.subr.bf16.mxu0 0
    %1100 = vmatpush1.bf16.xpose.msra.mxu0 0
    %1101 = vmatprep.subr.bf16.mxu0 0
    %1102 = vmatpush1.bf16.xpose.msra.mxu0 0
    %1103 = vmatprep.subr.bf16.mxu0 0
    %1104 = vmatpush1.bf16.xpose.msra.mxu0 0
    %1105 = vmatprep.mubr.bf16.mxu0 0
    %1106 = vmatmul.mubr.bf16.gmra.mrb[0].mxu0 %v1068
    %v1107 = vpop.f32.mrb[0].mxu0
    %v1108 = vadd.f32 0.0, %v1107
    %v1109 = vpop.f32.mrb[0].mxu0
    %v1110 = vpop.f32.mrb[0].mxu0
    %v1111 = vpop.f32.mrb[0].mxu0
    %1112 = vdwg.mxu0
    %v1113 = vsel %vm326, %v1108, -inf
    %1114 = vmax.xlane.f32.xlu0 %v1113
    %v1115 = vpop.xlane.xlu0 %1114
    %v1116 = vsub.f32 %v1108, %v1115
    %v1117 = vmul.f32 %v1116, 1.442695
    %v1118 = vpow.pop %v1117
    %v1119 = vsel %vm326, %v1118, 0.0
    %1120 = vadd.xlane.f32.xlu0 %v1119
    %v1121 = vpop.xlane.xlu0 %1120
    %v1122 = vrcp.pop %v1121
    %v1123 = vmul.f32 %v1118, %v1122
    %v1124 = vpack.c.bf16 %v1123, %v1123
    %1125 = vrot.lane.b32.xlu0 %v1015, 120
    %v1126 = vpop.permute.xlu0 %1125
    %v1128 = vsel %vm326, %v1124, 0
    %v1131 = vsel %vm388, %v1126, 0
    %1133 = vmatprep.subr.bf16.mxu0 0
    %1134 = vmatpush1.bf16.msra.mxu0 %v1131
    %1135 = vmatprep.subr.bf16.mxu0 0
    %1136 = vmatpush1.bf16.msra.mxu0 0
    %1137 = vmatprep.subr.bf16.mxu0 0
    %1138 = vmatpush1.bf16.msra.mxu0 0
    %1139 = vmatprep.subr.bf16.mxu0 0
    %1140 = vmatpush1.bf16.msra.mxu0 0
    %1141 = vmatprep.subr.bf16.mxu0 0
    %1142 = vmatpush1.bf16.msra.mxu0 0
    %1143 = vmatprep.subr.bf16.mxu0 0
    %1144 = vmatpush1.bf16.msra.mxu0 0
    %1145 = vmatprep.subr.bf16.mxu0 0
    %1146 = vmatpush1.bf16.msra.mxu0 0
    %1147 = vmatprep.subr.bf16.mxu0 0
    %1148 = vmatpush1.bf16.msra.mxu0 0
    %1149 = vmatprep.subr.bf16.mxu0 0
    %1150 = vmatpush1.bf16.msra.mxu0 0
    %1151 = vmatprep.subr.bf16.mxu0 0
    %1152 = vmatpush1.bf16.msra.mxu0 0
    %1153 = vmatprep.subr.bf16.mxu0 0
    %1154 = vmatpush1.bf16.msra.mxu0 0
    %1155 = vmatprep.subr.bf16.mxu0 0
    %1156 = vmatpush1.bf16.msra.mxu0 0
    %1157 = vmatprep.subr.bf16.mxu0 0
    %1158 = vmatpush1.bf16.msra.mxu0 0
    %1159 = vmatprep.subr.bf16.mxu0 0
    %1160 = vmatpush1.bf16.msra.mxu0 0
    %1161 = vmatprep.subr.bf16.mxu0 0
    %1162 = vmatpush1.bf16.msra.mxu0 0
    %1163 = vmatprep.subr.bf16.mxu0 0
    %1164 = vmatpush1.bf16.msra.mxu0 0
    %1165 = vmatprep.mubr.bf16.mxu0 0
    %1166 = vmatmul.mubr.bf16.gmra.mrb[0].mxu0 %v1128
    %v1167 = vpop.f32.mrb[0].mxu0
    %v1168 = vadd.f32 0.0, %v1167
    %v1169 = vpop.f32.mrb[0].mxu0
    %v1170 = vpop.f32.mrb[0].mxu0
    %v1171 = vpop.f32.mrb[0].mxu0
    %1172 = vdwg.mxu0
    %v1173 = vpack.c.bf16 %v1168, %v1168
    %v1175 = vsel %vm326, %v1173, 0
    %1177 = vmatprep.subr.bf16.mxu0 0
    %1178 = vmatpush1.bf16.msra.mxu0 %v551
    %1179 = vmatprep.subr.bf16.mxu0 0
    %1180 = vmatpush1.bf16.msra.mxu0 0
    %1181 = vmatprep.subr.bf16.mxu0 0
    %1182 = vmatpush1.bf16.msra.mxu0 0
    %1183 = vmatprep.subr.bf16.mxu0 0
    %1184 = vmatpush1.bf16.msra.mxu0 0
    %1185 = vmatprep.subr.bf16.mxu0 0
    %1186 = vmatpush1.bf16.msra.mxu0 0
    %1187 = vmatprep.subr.bf16.mxu0 0
    %1188 = vmatpush1.bf16.msra.mxu0 0
    %1189 = vmatprep.subr.bf16.mxu0 0
    %1190 = vmatpush1.bf16.msra.mxu0 0
    %1191 = vmatprep.subr.bf16.mxu0 0
    %1192 = vmatpush1.bf16.msra.mxu0 0
    %1193 = vmatprep.subr.bf16.mxu0 0
    %1194 = vmatpush1.bf16.msra.mxu0 0
    %1195 = vmatprep.subr.bf16.mxu0 0
    %1196 = vmatpush1.bf16.msra.mxu0 0
    %1197 = vmatprep.subr.bf16.mxu0 0
    %1198 = vmatpush1.bf16.msra.mxu0 0
    %1199 = vmatprep.subr.bf16.mxu0 0
    %1200 = vmatpush1.bf16.msra.mxu0 0
    %1201 = vmatprep.subr.bf16.mxu0 0
    %1202 = vmatpush1.bf16.msra.mxu0 0
    %1203 = vmatprep.subr.bf16.mxu0 0
    %1204 = vmatpush1.bf16.msra.mxu0 0
    %1205 = vmatprep.subr.bf16.mxu0 0
    %1206 = vmatpush1.bf16.msra.mxu0 0
    %1207 = vmatprep.subr.bf16.mxu0 0
    %1208 = vmatpush1.bf16.msra.mxu0 0
    %1209 = vmatprep.mubr.bf16.mxu0 0
    %1210 = vmatmul.mubr.bf16.gmra.mrb[0].mxu0 %v1175
    %v1211 = vpop.f32.mrb[0].mxu0
    %v1212 = vadd.f32 0.0, %v1211
    %v1213 = vpop.f32.mrb[0].mxu0
    %v1214 = vpop.f32.mrb[0].mxu0
    %v1215 = vpop.f32.mrb[0].mxu0
    %1216 = vdwg.mxu0
    %v1218 = vsel %vm326, %v1062, 0
    %1220 = vmatprep.subr.bf16.mxu0 0
    %1221 = vmatpush1.bf16.msra.mxu0 %v597
    %1222 = vmatprep.subr.bf16.mxu0 0
    %1223 = vmatpush1.bf16.msra.mxu0 0
    %1224 = vmatprep.subr.bf16.mxu0 0
    %1225 = vmatpush1.bf16.msra.mxu0 0
    %1226 = vmatprep.subr.bf16.mxu0 0
    %1227 = vmatpush1.bf16.msra.mxu0 0
    %1228 = vmatprep.subr.bf16.mxu0 0
    %1229 = vmatpush1.bf16.msra.mxu0 0
    %1230 = vmatprep.subr.bf16.mxu0 0
    %1231 = vmatpush1.bf16.msra.mxu0 0
    %1232 = vmatprep.subr.bf16.mxu0 0
    %1233 = vmatpush1.bf16.msra.mxu0 0
    %1234 = vmatprep.subr.bf16.mxu0 0
    %1235 = vmatpush1.bf16.msra.mxu0 0
    %1236 = vmatprep.subr.bf16.mxu0 0
    %1237 = vmatpush1.bf16.msra.mxu0 0
    %1238 = vmatprep.subr.bf16.mxu0 0
    %1239 = vmatpush1.bf16.msra.mxu0 0
    %1240 = vmatprep.subr.bf16.mxu0 0
    %1241 = vmatpush1.bf16.msra.mxu0 0
    %1242 = vmatprep.subr.bf16.mxu0 0
    %1243 = vmatpush1.bf16.msra.mxu0 0
    %1244 = vmatprep.subr.bf16.mxu0 0
    %1245 = vmatpush1.bf16.msra.mxu0 0
    %1246 = vmatprep.subr.bf16.mxu0 0
    %1247 = vmatpush1.bf16.msra.mxu0 0
    %1248 = vmatprep.subr.bf16.mxu0 0
    %1249 = vmatpush1.bf16.msra.mxu0 0
    %1250 = vmatprep.subr.bf16.mxu0 0
    %1251 = vmatpush1.bf16.msra.mxu0 0
    %1252 = vmatprep.mubr.bf16.mxu0 0
    %1253 = vmatmul.mubr.bf16.gmra.mrb[0].mxu0 %v1218
    %v1254 = vpop.f32.mrb[0].mxu0
    %v1255 = vadd.f32 %v1212, %v1254
    %v1256 = vpop.f32.mrb[0].mxu0
    %v1257 = vpop.f32.mrb[0].mxu0
    %v1258 = vpop.f32.mrb[0].mxu0
    %1259 = vdwg.mxu0
    %1260 = vrot.lane.b32.xlu0 %v955, 112
    %v1261 = vpop.permute.xlu0 %1260
    %1262 = vrot.lane.b32.xlu0 %v956, 112
    %v1263 = vpop.permute.xlu0 %1262
    %v1265 = vsel %vm326, %v1261, 0
    %v1268 = vsel %vm326, %v1263, 0
    %1270 = vmatprep.subr.bf16.mxu0 0
    %1271 = vmatpush1.bf16.xpose.msra.mxu0 %v1268
    %1272 = vmatprep.subr.bf16.mxu0 0
    %1273 = vmatpush1.bf16.xpose.msra.mxu0 0
    %1274 = vmatprep.subr.bf16.mxu0 0
    %1275 = vmatpush1.bf16.xpose.msra.mxu0 0
    %1276 = vmatprep.subr.bf16.mxu0 0
    %1277 = vmatpush1.bf16.xpose.msra.mxu0 0
    %1278 = vmatprep.subr.bf16.mxu0 0
    %1279 = vmatpush1.bf16.xpose.msra.mxu0 0
    %1280 = vmatprep.subr.bf16.mxu0 0
    %1281 = vmatpush1.bf16.xpose.msra.mxu0 0
    %1282 = vmatprep.subr.bf16.mxu0 0
    %1283 = vmatpush1.bf16.xpose.msra.mxu0 0
    %1284 = vmatprep.subr.bf16.mxu0 0
    %1285 = vmatpush1.bf16.xpose.msra.mxu0 0
    %1286 = vmatprep.subr.bf16.mxu0 0
    %1287 = vmatpush1.bf16.xpose.msra.mxu0 0
    %1288 = vmatprep.subr.bf16.mxu0 0
    %1289 = vmatpush1.bf16.xpose.msra.mxu0 0
    %1290 = vmatprep.subr.bf16.mxu0 0
    %1291 = vmatpush1.bf16.xpose.msra.mxu0 0
    %1292 = vmatprep.subr.bf16.mxu0 0
    %1293 = vmatpush1.bf16.xpose.msra.mxu0 0
    %1294 = vmatprep.subr.bf16.mxu0 0
    %1295 = vmatpush1.bf16.xpose.msra.mxu0 0
    %1296 = vmatprep.subr.bf16.mxu0 0
    %1297 = vmatpush1.bf16.xpose.msra.mxu0 0
    %1298 = vmatprep.subr.bf16.mxu0 0
    %1299 = vmatpush1.bf16.xpose.msra.mxu0 0
    %1300 = vmatprep.subr.bf16.mxu0 0
    %1301 = vmatpush1.bf16.xpose.msra.mxu0 0
    %1302 = vmatprep.mubr.bf16.mxu0 0
    %1303 = vmatmul.mubr.bf16.gmra.mrb[0].mxu0 %v1265
    %v1304 = vpop.f32.mrb[0].mxu0
    %v1305 = vadd.f32 0.0, %v1304
    %v1306 = vpop.f32.mrb[0].mxu0
    %v1307 = vpop.f32.mrb[0].mxu0
    %v1308 = vpop.f32.mrb[0].mxu0
    %1309 = vdwg.mxu0
    %v1310 = vsel %vm326, %v1305, -inf
    %1311 = vmax.xlane.f32.xlu0 %v1310
    %v1312 = vpop.xlane.xlu0 %1311
    %v1313 = vsub.f32 %v1305, %v1312
    %v1314 = vmul.f32 %v1313, 1.442695
    %v1315 = vpow.pop %v1314
    %v1316 = vsel %vm326, %v1315, 0.0
    %1317 = vadd.xlane.f32.xlu0 %v1316
    %v1318 = vpop.xlane.xlu0 %1317
    %v1319 = vrcp.pop %v1318
    %v1320 = vmul.f32 %v1315, %v1319
    %v1321 = vpack.c.bf16 %v1320, %v1320
    %1322 = vrot.lane.b32.xlu0 %v1015, 112
    %v1323 = vpop.permute.xlu0 %1322
    %v1325 = vsel %vm326, %v1321, 0
    %v1328 = vsel %vm388, %v1323, 0
    %1330 = vmatprep.subr.bf16.mxu0 0
    %1331 = vmatpush1.bf16.msra.mxu0 %v1328
    %1332 = vmatprep.subr.bf16.mxu0 0
    %1333 = vmatpush1.bf16.msra.mxu0 0
    %1334 = vmatprep.subr.bf16.mxu0 0
    %1335 = vmatpush1.bf16.msra.mxu0 0
    %1336 = vmatprep.subr.bf16.mxu0 0
    %1337 = vmatpush1.bf16.msra.mxu0 0
    %1338 = vmatprep.subr.bf16.mxu0 0
    %1339 = vmatpush1.bf16.msra.mxu0 0
    %1340 = vmatprep.subr.bf16.mxu0 0
    %1341 = vmatpush1.bf16.msra.mxu0 0
    %1342 = vmatprep.subr.bf16.mxu0 0
    %1343 = vmatpush1.bf16.msra.mxu0 0
    %1344 = vmatprep.subr.bf16.mxu0 0
    %1345 = vmatpush1.bf16.msra.mxu0 0
    %1346 = vmatprep.subr.bf16.mxu0 0
    %1347 = vmatpush1.bf16.msra.mxu0 0
    %1348 = vmatprep.subr.bf16.mxu0 0
    %1349 = vmatpush1.bf16.msra.mxu0 0
    %1350 = vmatprep.subr.bf16.mxu0 0
    %1351 = vmatpush1.bf16.msra.mxu0 0
    %1352 = vmatprep.subr.bf16.mxu0 0
    %1353 = vmatpush1.bf16.msra.mxu0 0
    %1354 = vmatprep.subr.bf16.mxu0 0
    %1355 = vmatpush1.bf16.msra.mxu0 0
    %1356 = vmatprep.subr.bf16.mxu0 0
    %1357 = vmatpush1.bf16.msra.mxu0 0
    %1358 = vmatprep.subr.bf16.mxu0 0
    %1359 = vmatpush1.bf16.msra.mxu0 0
    %1360 = vmatprep.subr.bf16.mxu0 0
    %1361 = vmatpush1.bf16.msra.mxu0 0
    %1362 = vmatprep.mubr.bf16.mxu0 0
    %1363 = vmatmul.mubr.bf16.gmra.mrb[0].mxu0 %v1325
    %v1364 = vpop.f32.mrb[0].mxu0
    %v1365 = vadd.f32 0.0, %v1364
    %v1366 = vpop.f32.mrb[0].mxu0
    %v1367 = vpop.f32.mrb[0].mxu0
    %v1368 = vpop.f32.mrb[0].mxu0
    %1369 = vdwg.mxu0
    %v1370 = vpack.c.bf16 %v1365, %v1365
    %v1372 = vsel %vm326, %v1370, 0
    %1374 = vmatprep.subr.bf16.mxu0 0
    %1375 = vmatpush1.bf16.msra.mxu0 %v754
    %1376 = vmatprep.subr.bf16.mxu0 0
    %1377 = vmatpush1.bf16.msra.mxu0 0
    %1378 = vmatprep.subr.bf16.mxu0 0
    %1379 = vmatpush1.bf16.msra.mxu0 0
    %1380 = vmatprep.subr.bf16.mxu0 0
    %1381 = vmatpush1.bf16.msra.mxu0 0
    %1382 = vmatprep.subr.bf16.mxu0 0
    %1383 = vmatpush1.bf16.msra.mxu0 0
    %1384 = vmatprep.subr.bf16.mxu0 0
    %1385 = vmatpush1.bf16.msra.mxu0 0
    %1386 = vmatprep.subr.bf16.mxu0 0
    %1387 = vmatpush1.bf16.msra.mxu0 0
    %1388 = vmatprep.subr.bf16.mxu0 0
    %1389 = vmatpush1.bf16.msra.mxu0 0
    %1390 = vmatprep.subr.bf16.mxu0 0
    %1391 = vmatpush1.bf16.msra.mxu0 0
    %1392 = vmatprep.subr.bf16.mxu0 0
    %1393 = vmatpush1.bf16.msra.mxu0 0
    %1394 = vmatprep.subr.bf16.mxu0 0
    %1395 = vmatpush1.bf16.msra.mxu0 0
    %1396 = vmatprep.subr.bf16.mxu0 0
    %1397 = vmatpush1.bf16.msra.mxu0 0
    %1398 = vmatprep.subr.bf16.mxu0 0
    %1399 = vmatpush1.bf16.msra.mxu0 0
    %1400 = vmatprep.subr.bf16.mxu0 0
    %1401 = vmatpush1.bf16.msra.mxu0 0
    %1402 = vmatprep.subr.bf16.mxu0 0
    %1403 = vmatpush1.bf16.msra.mxu0 0
    %1404 = vmatprep.subr.bf16.mxu0 0
    %1405 = vmatpush1.bf16.msra.mxu0 0
    %1406 = vmatprep.mubr.bf16.mxu0 0
    %1407 = vmatmul.mubr.bf16.gmra.mrb[0].mxu0 %v1372
    %v1408 = vpop.f32.mrb[0].mxu0
    %v1409 = vadd.f32 0.0, %v1408
    %v1410 = vpop.f32.mrb[0].mxu0
    %v1411 = vpop.f32.mrb[0].mxu0
    %v1412 = vpop.f32.mrb[0].mxu0
    %1413 = vdwg.mxu0
    %v1414 = vadd.f32 %v1255, %v1409
    %1415 = vrot.lane.b32.xlu0 %v955, 104
    %v1416 = vpop.permute.xlu0 %1415
    %1417 = vrot.lane.b32.xlu0 %v956, 104
    %v1418 = vpop.permute.xlu0 %1417
    %v1420 = vsel %vm326, %v1416, 0
    %v1423 = vsel %vm326, %v1418, 0
    %1425 = vmatprep.subr.bf16.mxu0 0
    %1426 = vmatpush1.bf16.xpose.msra.mxu0 %v1423
    %1427 = vmatprep.subr.bf16.mxu0 0
    %1428 = vmatpush1.bf16.xpose.msra.mxu0 0
    %1429 = vmatprep.subr.bf16.mxu0 0
    %1430 = vmatpush1.bf16.xpose.msra.mxu0 0
    %1431 = vmatprep.subr.bf16.mxu0 0
    %1432 = vmatpush1.bf16.xpose.msra.mxu0 0
    %1433 = vmatprep.subr.bf16.mxu0 0
    %1434 = vmatpush1.bf16.xpose.msra.mxu0 0
    %1435 = vmatprep.subr.bf16.mxu0 0
    %1436 = vmatpush1.bf16.xpose.msra.mxu0 0
    %1437 = vmatprep.subr.bf16.mxu0 0
    %1438 = vmatpush1.bf16.xpose.msra.mxu0 0
    %1439 = vmatprep.subr.bf16.mxu0 0
    %1440 = vmatpush1.bf16.xpose.msra.mxu0 0
    %1441 = vmatprep.subr.bf16.mxu0 0
    %1442 = vmatpush1.bf16.xpose.msra.mxu0 0
    %1443 = vmatprep.subr.bf16.mxu0 0
    %1444 = vmatpush1.bf16.xpose.msra.mxu0 0
    %1445 = vmatprep.subr.bf16.mxu0 0
    %1446 = vmatpush1.bf16.xpose.msra.mxu0 0
    %1447 = vmatprep.subr.bf16.mxu0 0
    %1448 = vmatpush1.bf16.xpose.msra.mxu0 0
    %1449 = vmatprep.subr.bf16.mxu0 0
    %1450 = vmatpush1.bf16.xpose.msra.mxu0 0
    %1451 = vmatprep.subr.bf16.mxu0 0
    %1452 = vmatpush1.bf16.xpose.msra.mxu0 0
    %1453 = vmatprep.subr.bf16.mxu0 0
    %1454 = vmatpush1.bf16.xpose.msra.mxu0 0
    %1455 = vmatprep.subr.bf16.mxu0 0
    %1456 = vmatpush1.bf16.xpose.msra.mxu0 0
    %1457 = vmatprep.mubr.bf16.mxu0 0
    %1458 = vmatmul.mubr.bf16.gmra.mrb[0].mxu0 %v1420
    %v1459 = vpop.f32.mrb[0].mxu0
    %v1460 = vadd.f32 0.0, %v1459
    %v1461 = vpop.f32.mrb[0].mxu0
    %v1462 = vpop.f32.mrb[0].mxu0
    %v1463 = vpop.f32.mrb[0].mxu0
    %1464 = vdwg.mxu0
    %v1465 = vsel %vm326, %v1460, -inf
    %1466 = vmax.xlane.f32.xlu0 %v1465
    %v1467 = vpop.xlane.xlu0 %1466
    %v1468 = vsub.f32 %v1460, %v1467
    %v1469 = vmul.f32 %v1468, 1.442695
    %v1470 = vpow.pop %v1469
    %v1471 = vsel %vm326, %v1470, 0.0
    %1472 = vadd.xlane.f32.xlu0 %v1471
    %v1473 = vpop.xlane.xlu0 %1472
    %v1474 = vrcp.pop %v1473
    %v1475 = vmul.f32 %v1470, %v1474
    %v1476 = vpack.c.bf16 %v1475, %v1475
    %1477 = vrot.lane.b32.xlu0 %v1015, 104
    %v1478 = vpop.permute.xlu0 %1477
    %v1480 = vsel %vm326, %v1476, 0
    %v1483 = vsel %vm388, %v1478, 0
    %1485 = vmatprep.subr.bf16.mxu0 0
    %1486 = vmatpush1.bf16.msra.mxu0 %v1483
    %1487 = vmatprep.subr.bf16.mxu0 0
    %1488 = vmatpush1.bf16.msra.mxu0 0
    %1489 = vmatprep.subr.bf16.mxu0 0
    %1490 = vmatpush1.bf16.msra.mxu0 0
    %1491 = vmatprep.subr.bf16.mxu0 0
    %1492 = vmatpush1.bf16.msra.mxu0 0
    %1493 = vmatprep.subr.bf16.mxu0 0
    %1494 = vmatpush1.bf16.msra.mxu0 0
    %1495 = vmatprep.subr.bf16.mxu0 0
    %1496 = vmatpush1.bf16.msra.mxu0 0
    %1497 = vmatprep.subr.bf16.mxu0 0
    %1498 = vmatpush1.bf16.msra.mxu0 0
    %1499 = vmatprep.subr.bf16.mxu0 0
    %1500 = vmatpush1.bf16.msra.mxu0 0
    %1501 = vmatprep.subr.bf16.mxu0 0
    %1502 = vmatpush1.bf16.msra.mxu0 0
    %1503 = vmatprep.subr.bf16.mxu0 0
    %1504 = vmatpush1.bf16.msra.mxu0 0
    %1505 = vmatprep.subr.bf16.mxu0 0
    %1506 = vmatpush1.bf16.msra.mxu0 0
    %1507 = vmatprep.subr.bf16.mxu0 0
    %1508 = vmatpush1.bf16.msra.mxu0 0
    %1509 = vmatprep.subr.bf16.mxu0 0
    %1510 = vmatpush1.bf16.msra.mxu0 0
    %1511 = vmatprep.subr.bf16.mxu0 0
    %1512 = vmatpush1.bf16.msra.mxu0 0
    %1513 = vmatprep.subr.bf16.mxu0 0
    %1514 = vmatpush1.bf16.msra.mxu0 0
    %1515 = vmatprep.subr.bf16.mxu0 0
    %1516 = vmatpush1.bf16.msra.mxu0 0
    %1517 = vmatprep.mubr.bf16.mxu0 0
    %1518 = vmatmul.mubr.bf16.gmra.mrb[0].mxu0 %v1480
    %v1519 = vpop.f32.mrb[0].mxu0
    %v1520 = vadd.f32 0.0, %v1519
    %v1521 = vpop.f32.mrb[0].mxu0
    %v1522 = vpop.f32.mrb[0].mxu0
    %v1523 = vpop.f32.mrb[0].mxu0
    %1524 = vdwg.mxu0
    %v1525 = vpack.c.bf16 %v1520, %v1520
    %v1527 = vsel %vm326, %v1525, 0
    %1529 = vmatprep.subr.bf16.mxu0 0
    %1530 = vmatpush1.bf16.msra.mxu0 %v912
    %1531 = vmatprep.subr.bf16.mxu0 0
    %1532 = vmatpush1.bf16.msra.mxu0 0
    %1533 = vmatprep.subr.bf16.mxu0 0
    %1534 = vmatpush1.bf16.msra.mxu0 0
    %1535 = vmatprep.subr.bf16.mxu0 0
    %1536 = vmatpush1.bf16.msra.mxu0 0
    %1537 = vmatprep.subr.bf16.mxu0 0
    %1538 = vmatpush1.bf16.msra.mxu0 0
    %1539 = vmatprep.subr.bf16.mxu0 0
    %1540 = vmatpush1.bf16.msra.mxu0 0
    %1541 = vmatprep.subr.bf16.mxu0 0
    %1542 = vmatpush1.bf16.msra.mxu0 0
    %1543 = vmatprep.subr.bf16.mxu0 0
    %1544 = vmatpush1.bf16.msra.mxu0 0
    %1545 = vmatprep.subr.bf16.mxu0 0
    %1546 = vmatpush1.bf16.msra.mxu0 0
    %1547 = vmatprep.subr.bf16.mxu0 0
    %1548 = vmatpush1.bf16.msra.mxu0 0
    %1549 = vmatprep.subr.bf16.mxu0 0
    %1550 = vmatpush1.bf16.msra.mxu0 0
    %1551 = vmatprep.subr.bf16.mxu0 0
    %1552 = vmatpush1.bf16.msra.mxu0 0
    %1553 = vmatprep.subr.bf16.mxu0 0
    %1554 = vmatpush1.bf16.msra.mxu0 0
    %1555 = vmatprep.subr.bf16.mxu0 0
    %1556 = vmatpush1.bf16.msra.mxu0 0
    %1557 = vmatprep.subr.bf16.mxu0 0
    %1558 = vmatpush1.bf16.msra.mxu0 0
    %1559 = vmatprep.subr.bf16.mxu0 0
    %1560 = vmatpush1.bf16.msra.mxu0 0
    %1561 = vmatprep.mubr.bf16.mxu0 0
    %1562 = vmatmul.mubr.bf16.gmra.mrb[0].mxu0 %v1527
    %v1563 = vpop.f32.mrb[0].mxu0
    %v1564 = vadd.f32 0.0, %v1563
    %v1565 = vpop.f32.mrb[0].mxu0
    %v1566 = vpop.f32.mrb[0].mxu0
    %v1567 = vpop.f32.mrb[0].mxu0
    %1568 = vdwg.mxu0
    %v1569 = vadd.f32 %v1414, %v1564
    %v1570 = vld [vmem:[#allocation8] sm:$0x1]
    %v1572 = vlaneseq
    %v1573 = vshrl.u32 %v1572, 7
    %v1574 = vsub.s32 0, %v1573
    %v1575 = vrot.slane %v1570, %v1574
    %v1577 = vadd.f32 %v954, %v1575
    %v1578 = vadd.f32 %v1569, %v1575
    %v1579 = vadd.f32 %v120, %v1577
    %v1580 = vadd.f32 %v121, %v1578
    %v1581 = vsel %vm146, %v1579, 0.0
    %1582 = vadd.xlane.f32.xlu0 %v1581
    %v1583 = vpop.xlane.xlu0 %1582
    %v1584 = vsel %vm146, %v1580, 0.0
    %1585 = vadd.xlane.f32.xlu0 %v1584
    %v1586 = vpop.xlane.xlu0 %1585
    %v1587 = vrcp.pop 32.0
    %v1588 = vmul.f32 %v1583, %v1587
    %v1589 = vmul.f32 %v1586, %v1587
    %v1590 = vsub.f32 %v1579, %v1588
    %v1591 = vsub.f32 %v1580, %v1589
    %v1592 = vmul.f32 %v1590, %v1590
    %v1593 = vmul.f32 %v1591, %v1591
    %v1594 = vsel %vm146, %v1592, 0.0
    %1595 = vadd.xlane.f32.xlu0 %v1594
    %v1596 = vpop.xlane.xlu0 %1595
    %v1597 = vsel %vm146, %v1593, 0.0
    %1598 = vadd.xlane.f32.xlu0 %v1597
    %v1599 = vpop.xlane.xlu0 %1598
    %v1600 = vmul.f32 %v1596, %v1587
    %v1601 = vmul.f32 %v1599, %v1587
    %v1602 = vadd.f32 %v1600, 1e-05
    %v1603 = vadd.f32 %v1601, 1e-05
    %v1604 = vrsqrt.pop %v1602
    %v1605 = vrsqrt.pop %v1603
    %v1606 = vmul.f32 %v1590, %v1604
    %v1607 = vmul.f32 %v1591, %v1605
    %v1608 = vld [vmem:[#allocation10] sm:$0x1]
    %v1610 = vlaneseq
    %v1611 = vshrl.u32 %v1610, 7
    %v1612 = vsub.s32 0, %v1611
    %v1613 = vrot.slane %v1608, %v1612
    %v1615 = vmul.f32 %v1606, %v1613
    %v1616 = vmul.f32 %v1607, %v1613
    %v1617 = vld [vmem:[%s10] sm:$0x1]
    %v1619 = vlaneseq
    %v1620 = vshrl.u32 %v1619, 7
    %v1621 = vsub.s32 0, %v1620
    %v1622 = vrot.slane %v1617, %v1621
    %v1624 = vadd.f32 %v1615, %v1622
    %v1625 = vadd.f32 %v1616, %v1622
    %v1626 = vpack.c.bf16 %v1625, %v1624
    %v1627 = vld [vmem:[%s11] sm:$0xf]
    %v1628 = vld [vmem:[%s11 + $0x4] sm:$0xf]
    %v1629 = vld [vmem:[%s11 + $0x8] sm:$0xf]
    %v1630 = vld [vmem:[%s11 + $0xc] sm:$0xf]
    %v1631 = vld [vmem:[%s12] sm:$0x1]
    %v1633 = vlaneseq
    %v1634 = vshrl.u32 %v1633, 7
    %v1635 = vsub.s32 0, %v1634
    %v1636 = vrot.slane %v1631, %v1635
    %v1642 = vunpack.c.l.b16 %v1627
    %v1643 = vunpack.c.l.b16 %v1628
    %v1644 = vunpack.c.l.b16 %v1629
    %v1645 = vunpack.c.l.b16 %v1630
    %v1646 = vpack.c.b16 %v1643, %v1642
    %v1647 = vpack.c.b16 %v1645, %v1644
    %v1651 = vsel %vm146, %v1626, 0
    %1653 = vmatprep.subr.bf16.mxu0 0
    %1654 = vmatpush1.bf16.msra.mxu0 %v1646
    %1655 = vmatprep.subr.bf16.mxu0 0
    %1656 = vmatpush1.bf16.msra.mxu0 %v1647
    %1657 = vmatprep.subr.bf16.mxu0 0
    %1658 = vmatpush1.bf16.msra.mxu0 0
    %1659 = vmatprep.subr.bf16.mxu0 0
    %1660 = vmatpush1.bf16.msra.mxu0 0
    %1661 = vmatprep.subr.bf16.mxu0 0
    %1662 = vmatpush1.bf16.msra.mxu0 0
    %1663 = vmatprep.subr.bf16.mxu0 0
    %1664 = vmatpush1.bf16.msra.mxu0 0
    %1665 = vmatprep.subr.bf16.mxu0 0
    %1666 = vmatpush1.bf16.msra.mxu0 0
    %1667 = vmatprep.subr.bf16.mxu0 0
    %1668 = vmatpush1.bf16.msra.mxu0 0
    %1669 = vmatprep.subr.bf16.mxu0 0
    %1670 = vmatpush1.bf16.msra.mxu0 0
    %1671 = vmatprep.subr.bf16.mxu0 0
    %1672 = vmatpush1.bf16.msra.mxu0 0
    %1673 = vmatprep.subr.bf16.mxu0 0
    %1674 = vmatpush1.bf16.msra.mxu0 0
    %1675 = vmatprep.subr.bf16.mxu0 0
    %1676 = vmatpush1.bf16.msra.mxu0 0
    %1677 = vmatprep.subr.bf16.mxu0 0
    %1678 = vmatpush1.bf16.msra.mxu0 0
    %1679 = vmatprep.subr.bf16.mxu0 0
    %1680 = vmatpush1.bf16.msra.mxu0 0
    %1681 = vmatprep.subr.bf16.mxu0 0
    %1682 = vmatpush1.bf16.msra.mxu0 0
    %1683 = vmatprep.subr.bf16.mxu0 0
    %1684 = vmatpush1.bf16.msra.mxu0 0
    %1685 = vmatprep.mubr.bf16.mxu0 0
    %1686 = vmatmul.mubr.bf16.gmra.mrb[0].mxu0 %v1651
    %v1687 = vpop.f32.mrb[0].mxu0
    %v1688 = vadd.f32 %v1636, %v1687
    %v1689 = vpop.f32.mrb[0].mxu0
    %v1690 = vpop.f32.mrb[0].mxu0
    %v1691 = vadd.f32 %v1636, %v1690
    %v1692 = vpop.f32.mrb[0].mxu0
    %1693 = vdwg.mxu0
    %v1694 = vmax.f32 %v1688, 0.0
    %v1695 = vmax.f32 %v1691, 0.0
    %v1696 = vpack.c.bf16 %v1695, %v1694
    %v1697 = vld [vmem:[%s13] sm:$0xf]
    %v1698 = vld [vmem:[%s13 + $0x4] sm:$0xf]
    %v1699 = vld [vmem:[%s13 + $0x8] sm:$0xf]
    %v1700 = vld [vmem:[%s13 + $0xc] sm:$0xf]
    %v1701 = vld [vmem:[%s13 + $0x10] sm:$0xf]
    %v1702 = vld [vmem:[%s13 + $0x14] sm:$0xf]
    %v1703 = vld [vmem:[%s13 + $0x18] sm:$0xf]
    %v1704 = vld [vmem:[%s13 + $0x1c] sm:$0xf]
    %v1705 = vld [vmem:[%s14] sm:$0x1]
    %v1707 = vlaneseq
    %v1708 = vshrl.u32 %v1707, 7
    %v1709 = vsub.s32 0, %v1708
    %v1710 = vrot.slane %v1705, %v1709
    %v1720 = vunpack.c.l.b16 %v1697
    %v1721 = vunpack.c.l.b16 %v1698
    %v1722 = vunpack.c.l.b16 %v1699
    %v1723 = vunpack.c.l.b16 %v1700
    %v1724 = vunpack.c.l.b16 %v1701
    %v1725 = vunpack.c.l.b16 %v1702
    %v1726 = vunpack.c.l.b16 %v1703
    %v1727 = vunpack.c.l.b16 %v1704
    %v1728 = vpack.c.b16 %v1721, %v1720
    %v1729 = vpack.c.b16 %v1723, %v1722
    %v1730 = vpack.c.b16 %v1725, %v1724
    %v1731 = vpack.c.b16 %v1727, %v1726
    %vm1736 = vcmask 523264
    %v1738 = vsel %vm1736, %v1696, 0
    %1740 = vmatprep.subr.bf16.mxu0 0
    %1741 = vmatpush1.bf16.msra.mxu0 %v1728
    %1742 = vmatprep.subr.bf16.mxu0 0
    %1743 = vmatpush1.bf16.msra.mxu0 %v1729
    %1744 = vmatprep.subr.bf16.mxu0 0
    %1745 = vmatpush1.bf16.msra.mxu0 %v1730
    %1746 = vmatprep.subr.bf16.mxu0 0
    %1747 = vmatpush1.bf16.msra.mxu0 %v1731
    %1748 = vmatprep.subr.bf16.mxu0 0
    %1749 = vmatpush1.bf16.msra.mxu0 0
    %1750 = vmatprep.subr.bf16.mxu0 0
    %1751 = vmatpush1.bf16.msra.mxu0 0
    %1752 = vmatprep.subr.bf16.mxu0 0
    %1753 = vmatpush1.bf16.msra.mxu0 0
    %1754 = vmatprep.subr.bf16.mxu0 0
    %1755 = vmatpush1.bf16.msra.mxu0 0
    %1756 = vmatprep.subr.bf16.mxu0 0
    %1757 = vmatpush1.bf16.msra.mxu0 0
    %1758 = vmatprep.subr.bf16.mxu0 0
    %1759 = vmatpush1.bf16.msra.mxu0 0
    %1760 = vmatprep.subr.bf16.mxu0 0
    %1761 = vmatpush1.bf16.msra.mxu0 0
    %1762 = vmatprep.subr.bf16.mxu0 0
    %1763 = vmatpush1.bf16.msra.mxu0 0
    %1764 = vmatprep.subr.bf16.mxu0 0
    %1765 = vmatpush1.bf16.msra.mxu0 0
    %1766 = vmatprep.subr.bf16.mxu0 0
    %1767 = vmatpush1.bf16.msra.mxu0 0
    %1768 = vmatprep.subr.bf16.mxu0 0
    %1769 = vmatpush1.bf16.msra.mxu0 0
    %1770 = vmatprep.subr.bf16.mxu0 0
    %1771 = vmatpush1.bf16.msra.mxu0 0
    %1772 = vmatprep.mubr.bf16.mxu0 0
    %1773 = vmatmul.mubr.bf16.gmra.mrb[0].mxu0 %v1738
    %v1774 = vpop.f32.mrb[0].mxu0
    %v1775 = vadd.f32 %v1710, %v1774
    %v1776 = vpop.f32.mrb[0].mxu0
    %v1777 = vpop.f32.mrb[0].mxu0
    %v1778 = vadd.f32 %v1710, %v1777
    %v1779 = vpop.f32.mrb[0].mxu0
    %1780 = vdwg.mxu0
    %v1781 = vadd.f32 %v1624, %v1775
    %v1782 = vadd.f32 %v1625, %v1778
    %v1783 = vsel %vm146, %v1781, 0.0
    %1784 = vadd.xlane.f32.xlu0 %v1783
    %v1785 = vpop.xlane.xlu0 %1784
    %v1786 = vsel %vm146, %v1782, 0.0
    %1787 = vadd.xlane.f32.xlu0 %v1786
    %v1788 = vpop.xlane.xlu0 %1787
    %v1789 = vmul.f32 %v1785, %v1587
    %v1790 = vmul.f32 %v1788, %v1587
    %v1791 = vsub.f32 %v1781, %v1789
    %v1792 = vsub.f32 %v1782, %v1790
    %v1793 = vmul.f32 %v1791, %v1791
    %v1794 = vmul.f32 %v1792, %v1792
    %v1795 = vsel %vm146, %v1793, 0.0
    %1796 = vadd.xlane.f32.xlu0 %v1795
    %v1797 = vpop.xlane.xlu0 %1796
    %v1798 = vsel %vm146, %v1794, 0.0
    %1799 = vadd.xlane.f32.xlu0 %v1798
    %v1800 = vpop.xlane.xlu0 %1799
    %v1801 = vmul.f32 %v1797, %v1587
    %v1802 = vmul.f32 %v1800, %v1587
    %v1803 = vadd.f32 %v1801, 1e-05
    %v1804 = vadd.f32 %v1802, 1e-05
    %v1805 = vrsqrt.pop %v1803
    %v1806 = vrsqrt.pop %v1804
    %v1807 = vmul.f32 %v1791, %v1805
    %v1808 = vmul.f32 %v1792, %v1806
    %v1809 = vld [vmem:[%s15] sm:$0x1]
    %v1811 = vlaneseq
    %v1812 = vshrl.u32 %v1811, 7
    %v1813 = vsub.s32 0, %v1812
    %v1814 = vrot.slane %v1809, %v1813
    %v1816 = vmul.f32 %v1807, %v1814
    %v1817 = vmul.f32 %v1808, %v1814
    %v1818 = vld [vmem:[%s16] sm:$0x1]
    %v1820 = vlaneseq
    %v1821 = vshrl.u32 %v1820, 7
    %v1822 = vsub.s32 0, %v1821
    %v1823 = vrot.slane %v1818, %v1822
    %v1825 = vadd.f32 %v1816, %v1823
    %v1826 = vadd.f32 %v1817, %v1823
    %1827 = vst.msk [vmem:[#allocation11] sm:$0xff] %vm146, %v1825
    %1828 = vst.msk [vmem:[#allocation11 + $0x8] sm:$0xff] %vm146, %v1826
    // Predicated region
    $region90: #{tpu_custom_call.1} parent=1 // pred_check
      _
    $region91: #{tpu_custom_call.1} parent=1 // pred_check_branch
      %1830 = sbr.rel (0) target = $region93
    $region92: #{tpu_custom_call.1} parent=1 // pred_region
      %s1832 = ssub.s32 256, 256
      %1833 = vsyncadd [#allocation4], %s1832
      %s1834 = sshll.u32 [#allocation11], 4
      %s1835 = int_to_ptr.vmem [resolvable:$true] %s1834
      %1840 = dma.vmem_to_hbm [thread:$0]  %s1835, 256, %s17, [#allocation4], 128, 128, 8
    $region93: #{tpu_custom_call.1} parent=1 // pred_fallthru
      _
    // Predicated region
    $region94: #{tpu_custom_call.1} parent=1 // pred_check
      _
    $region95: #{tpu_custom_call.1} parent=1 // pred_check_branch
      %1842 = sbr.rel (0) target = $region97
    $region96: #{tpu_custom_call.1} parent=1 // pred_region
      %1843 = dma.done [#allocation4], 256
    $region97: #{tpu_custom_call.1} parent=1 // pred_fallthru
      _
    %1844 = vsyncpa [#allocation3], 1
    %1845 = vsyncpa [#allocation6], 1
    %1846 = vsyncpa [#allocation9], 1
    %1847 = vsyncpa [#allocation4], 1

</llo_original>
